<compile_context>
chip_gen: v7x
topology: tpu7x:2x2x1
jax: 0.10.0
libtpu: 0.0.40
codegen_flags: <defaults>
</compile_context>

<pallas_src>
import jax
import jax.numpy as jnp
from jax.experimental import pallas as pl
from jax.experimental.pallas import tpu as pltpu

# Problem sizes (match the PyTorch module: input [1, 192, 25, 25]).
N, C_IN, H, W = 1, 192, 25, 25
C_OUT = 64
EPS = 1e-3
M_PIX = N * H * W                # 625 pixels


def conv_bn_relu_kernel(x_ref, w_ref, gb_ref, o_ref):
    # 1x1 conv as (c_blk, C_IN) @ (C_IN, M) on the MXU, f32 accumulation.
    y = jnp.dot(w_ref[...], x_ref[...],
                preferred_element_type=jnp.float32)          # (c_blk, M)

    # BatchNorm (training mode) batch statistics over the pixel axis.
    # Reductions as MXU dots against a ones column (MXU is idle after the
    # main matmul; keeps the serial XLU path short).
    ones = jnp.ones((M_PIX, 1), dtype=jnp.float32)
    s = jnp.dot(y, ones, preferred_element_type=jnp.float32)        # (c_blk, 1)
    ss = jnp.dot(y * y, ones, preferred_element_type=jnp.float32)   # (c_blk, 1)

    inv_m = 1.0 / float(M_PIX)
    mean = s * inv_m
    var = ss * inv_m - mean * mean            # biased variance (torch BN)
    var = jnp.maximum(var, 0.0)               # guard one-pass cancellation

    # Fold the BN affine into one per-channel scale + shift:
    #   o = max(y * a + c, 0),  a = gamma / sqrt(var + eps),  c = beta - mean * a
    gamma = gb_ref[:, 0:1]                    # (c_blk, 1)
    beta = gb_ref[:, 1:2]                     # (c_blk, 1)
    a = jax.lax.rsqrt(var + EPS) * gamma
    c = beta - mean * a
    o_ref[...] = jnp.maximum(y * a + c, 0.0)  # ReLU


def _num_channel_splits():
    """Use both TensorCores on v7x; single grid step on v5e/v6e (1 TC)."""
    try:
        kind = jax.devices()[0].device_kind.lower()
    except Exception:
        return 1
    return 2 if "v7" in kind else 1


def conv_bn_relu(x_nchw, weight_oihw, gamma, beta, *, num_splits=None):
    """x_nchw: (1, C_IN, H, W) f32; weight_oihw: (C_OUT, C_IN, 1, 1) f32."""
    n, cin, h, w = x_nchw.shape
    assert (n, cin, h, w) == (N, C_IN, H, W)

    if num_splits is None:
        num_splits = _num_channel_splits()
    assert C_OUT % num_splits == 0
    c_blk = C_OUT // num_splits

    # Contiguous-dim reshapes only (no transpose, no pad, no slice).
    x_cm = x_nchw.reshape(C_IN, M_PIX)                   # (C_IN, M)
    w_mat = weight_oihw.reshape(C_OUT, C_IN)             # (C_OUT, C_IN)
    gb = jnp.stack([gamma.astype(jnp.float32),
                    beta.astype(jnp.float32)], axis=1)   # (C_OUT, 2)

    grid_spec = pltpu.PrefetchScalarGridSpec(
        num_scalar_prefetch=0,
        grid=(num_splits,),
        in_specs=[
            pl.BlockSpec((C_IN, M_PIX), lambda i: (0, 0)),   # x replicated
            pl.BlockSpec((c_blk, C_IN), lambda i: (i, 0)),   # W, channel split
            pl.BlockSpec((c_blk, 2), lambda i: (i, 0)),      # fused gamma/beta
        ],
        out_specs=pl.BlockSpec((c_blk, M_PIX), lambda i: (i, 0)),
    )

    cost = pl.CostEstimate(
        flops=2 * M_PIX * C_IN * C_OUT        # conv matmul
              + 2 * 2 * M_PIX * C_OUT,        # two ones-column reductions
        transcendentals=C_OUT,
        bytes_accessed=4 * (num_splits * C_IN * M_PIX + C_OUT * C_IN
                            + 2 * C_OUT + C_OUT * M_PIX),
    )

    out_cm = pl.pallas_call(
        conv_bn_relu_kernel,
        out_shape=jax.ShapeDtypeStruct((C_OUT, M_PIX), jnp.float32),
        grid_spec=grid_spec,
        compiler_params=pltpu.CompilerParams(
            dimension_semantics=("parallel",)),
        cost_estimate=cost,
    )(x_cm, w_mat, gb)

    # (C_OUT, M) is already NCHW-flattened for N=1: free reshape back.
    return out_cm.reshape(N, C_OUT, H, W)


def reference(x_nchw, weight_oihw, gamma, beta):
    """Plain-JAX reference with identical (training-mode BN) semantics."""
    x_cm = x_nchw.reshape(C_IN, M_PIX)
    w_mat = weight_oihw.reshape(C_OUT, C_IN)
    y = w_mat @ x_cm                                      # (C_OUT, M)
    mean = jnp.mean(y, axis=1, keepdims=True)
    var = jnp.mean((y - mean) ** 2, axis=1, keepdims=True)  # biased
    bn = (y - mean) / jnp.sqrt(var + EPS) * gamma.reshape(-1, 1) \
         + beta.reshape(-1, 1)
    out = jnp.maximum(bn, 0.0)
    return out.reshape(N, C_OUT, H, W)


if __name__ == "__main__":
    key = jax.random.PRNGKey(0)
    k_x, k_w, k_g, k_b = jax.random.split(key, 4)

    x = jax.random.normal(k_x, (N, C_IN, H, W), dtype=jnp.float32)
    # Conv2d weight: (out_channels, in_channels, 1, 1)
    weight = jax.random.normal(k_w, (C_OUT, C_IN, 1, 1), dtype=jnp.float32) * 0.05
    # BatchNorm affine params (deterministic, non-trivial values).
    gamma = 1.0 + 0.1 * jax.random.normal(k_g, (C_OUT,), dtype=jnp.float32)
    beta = 0.1 * jax.random.normal(k_b, (C_OUT,), dtype=jnp.float32)

    out = conv_bn_relu(x, weight, gamma, beta)
    out = jax.block_until_ready(out)

    ref = jax.block_until_ready(reference(x, weight, gamma, beta))
    assert out.shape == (N, C_OUT, H, W)
    assert jnp.max(jnp.abs(out - ref)) < 1e-3, "mismatch vs reference"

    print("KERNEL_OK")
</pallas_src>

<mosaic_0001>
module attributes {stable_mosaic.version = 11 : i64} {
  func.func @conv_bn_relu_kernel(%arg0: i32, %arg1: memref<192x625xf32, #tpu.memory_space<vmem>>, %arg2: memref<64x192xf32, #tpu.memory_space<vmem>>, %arg3: memref<64x2xf32, #tpu.memory_space<vmem>>, %arg4: memref<64x625xf32, #tpu.memory_space<vmem>>) attributes {dimension_semantics = [#tpu.dimension_semantics<parallel>], iteration_bounds = array<i64: 1>, scalar_prefetch = 0 : i64, scratch_operands = 0 : i64, tpu.core_type = #tpu.core_type<tc>, window_params = [{pipeline_mode = #tpu.pipeline_mode<synchronous>, transform_indices = @transform_0, window_bounds = array<i64: 192, 625>}, {transform_indices = @transform_1, window_bounds = array<i64: 64, 192>}, {transform_indices = @transform_2, window_bounds = array<i64: 64, 2>}, {transform_indices = @transform_3, window_bounds = array<i64: 64, 625>}]} {
    %c0 = arith.constant 0 : index
    %c0_0 = arith.constant 0 : index
    %0 = vector.load %arg2[%c0, %c0_0] : memref<64x192xf32, #tpu.memory_space<vmem>>, vector<64x192xf32>
    %c0_1 = arith.constant 0 : index
    %c0_2 = arith.constant 0 : index
    %1 = vector.load %arg1[%c0_1, %c0_2] : memref<192x625xf32, #tpu.memory_space<vmem>>, vector<192x625xf32>
    %cst = arith.constant dense<0.000000e+00> : vector<64x625xf32>
    %2 = tpu.matmul %0, %1, %cst {dimension_numbers = #tpu.dot_dimension_numbers<[1], [0], [0], [1], [0, 0, 1, 1], [], []>} : vector<64x192xf32>, vector<192x625xf32>, vector<64x625xf32> -> vector<64x625xf32>
    %cst_3 = arith.constant 1.000000e+00 : f32
    %3 = vector.broadcast %cst_3 : f32 to vector<625x1xf32>
    %cst_4 = arith.constant dense<0.000000e+00> : vector<64x1xf32>
    %4 = tpu.matmul %2, %3, %cst_4 {dimension_numbers = #tpu.dot_dimension_numbers<[1], [0], [0], [1], [0, 0, 1, 1], [], []>} : vector<64x625xf32>, vector<625x1xf32>, vector<64x1xf32> -> vector<64x1xf32>
    %5 = arith.mulf %2, %2 : vector<64x625xf32>
    %cst_5 = arith.constant dense<0.000000e+00> : vector<64x1xf32>
    %6 = tpu.matmul %5, %3, %cst_5 {dimension_numbers = #tpu.dot_dimension_numbers<[1], [0], [0], [1], [0, 0, 1, 1], [], []>} : vector<64x625xf32>, vector<625x1xf32>, vector<64x1xf32> -> vector<64x1xf32>
    %cst_6 = arith.constant 1.600000e-03 : f32
    %7 = vector.broadcast %cst_6 : f32 to vector<64x1xf32>
    %8 = arith.mulf %4, %7 : vector<64x1xf32>
    %cst_7 = arith.constant 1.600000e-03 : f32
    %9 = vector.broadcast %cst_7 : f32 to vector<64x1xf32>
    %10 = arith.mulf %6, %9 : vector<64x1xf32>
    %11 = arith.mulf %8, %8 : vector<64x1xf32>
    %12 = arith.subf %10, %11 : vector<64x1xf32>
    %cst_8 = arith.constant 0.000000e+00 : f32
    %13 = vector.broadcast %cst_8 : f32 to vector<64x1xf32>
    %14 = arith.maximumf %12, %13 : vector<64x1xf32>
    %c0_9 = arith.constant 0 : index
    %c0_10 = arith.constant 0 : index
    %15 = vector.load %arg3[%c0_9, %c0_10] : memref<64x2xf32, #tpu.memory_space<vmem>>, vector<64x1xf32>
    %c0_11 = arith.constant 0 : index
    %c1 = arith.constant 1 : index
    %16 = vector.load %arg3[%c0_11, %c1] : memref<64x2xf32, #tpu.memory_space<vmem>>, vector<64x1xf32>
    %cst_12 = arith.constant 1.000000e-03 : f32
    %17 = vector.broadcast %cst_12 : f32 to vector<64x1xf32>
    %18 = arith.addf %14, %17 : vector<64x1xf32>
    %19 = math.rsqrt %18 : vector<64x1xf32>
    %20 = arith.mulf %19, %15 : vector<64x1xf32>
    %21 = arith.mulf %8, %20 : vector<64x1xf32>
    %22 = arith.subf %16, %21 : vector<64x1xf32>
    %23 = vector.broadcast %20 : vector<64x1xf32> to vector<64x625xf32>
    %24 = arith.mulf %2, %23 : vector<64x625xf32>
    %25 = vector.broadcast %22 : vector<64x1xf32> to vector<64x625xf32>
    %26 = arith.addf %24, %25 : vector<64x625xf32>
    %cst_13 = arith.constant 0.000000e+00 : f32
    %27 = vector.broadcast %cst_13 : f32 to vector<64x625xf32>
    %28 = arith.maximumf %26, %27 : vector<64x625xf32>
    %c0_14 = arith.constant 0 : index
    %c0_15 = arith.constant 0 : index
    %29 = vector.load %arg4[%c0_14, %c0_15] : memref<64x625xf32, #tpu.memory_space<vmem>>, vector<64x625xf32>
    tpu.vector_store %arg4[%c0_14, %c0_15], %28 {strides = array<i32>} : memref<64x625xf32, #tpu.memory_space<vmem>>, vector<64x625xf32>,
    return
  }
  func.func @transform_0(%arg0: i32) -> (i32, i32) {
    %c0_i32 = arith.constant 0 : i32
    %c0_i32_0 = arith.constant 0 : i32
    %c0_i32_1 = arith.constant 0 : i32
    return %c0_i32, %c0_i32_0 : i32, i32
  }
  func.func @transform_1(%arg0: i32) -> (i32, i32) {
    %c0_i32 = arith.constant 0 : i32
    %c0_i32_0 = arith.constant 0 : i32
    return %arg0, %c0_i32 : i32, i32
  }
  func.func @transform_2(%arg0: i32) -> (i32, i32) {
    %c0_i32 = arith.constant 0 : i32
    %c0_i32_0 = arith.constant 0 : i32
    return %arg0, %c0_i32 : i32, i32
  }
  func.func @transform_3(%arg0: i32) -> (i32, i32) {
    %c0_i32 = arith.constant 0 : i32
    %c0_i32_0 = arith.constant 0 : i32
    return %arg0, %c0_i32 : i32, i32
  }
}

</mosaic_0001>

<llo_original>
// kernel: tpu_custom_call.1
$region0: #{tpu_custom_call.1}
  #allocation0 [shape = 'u32[]', space=smem, size = 0x4, offset = 0x4, fixed_abs, tag = 'smem constant byte address 0x4 - core index']
  #allocation1 [shape = 'u32[144,128]{1,0:T(1,128)}', space=vmem, size = 0x12000, scoped, tag = 'internal scratch']
  %s0 = inlined_call_operand.hbm [shape: f32[192,625], index: 0, kind: input, shape index: {}]
  %s1 = inlined_call_operand.hbm [shape: f32[64,192], index: 1, kind: input, shape index: {}]
  %s2 = inlined_call_operand.vmem [shape: f32[64,2], index: 2, kind: input, shape index: {}]
  %s3 = inlined_call_operand.hbm [shape: f32[64,625], index: 3, kind: output, shape index: {}]
  %s4 = sld [smem:[#allocation0]]
  $region30: #{tpu_custom_call.1} parent=0
    _
  %s6 = ssub.s32 1, %s4
  %s7 = scalar_select 0, %s6, %s4
  $region1: #{tpu_custom_call.1} parent=0
    #allocation2 [shape = 'u8[491520]{0}', space=vmem, size = 0x78000, scoped, tag = 'input window, operand 0, single buffered']
    #allocation3 [shape = 's32[1]{0}', space=sflag, size = 0x4, scoped, tag = 'scoped memory for tpu_custom_call.1']
    #allocation4 [shape = 's32[1]{0}', space=sflag, size = 0x4, scoped, tag = 'scoped memory for tpu_custom_call.1']
    #allocation5 [shape = 'u8[65536]{0}', space=vmem, size = 0x10000, scoped, tag = 'input window, operand 1, single buffered']
    #allocation6 [shape = 's32[1]{0}', space=sflag, size = 0x4, scoped, tag = 'scoped memory for tpu_custom_call.1']
    #allocation7 [shape = 'u8[163840]{0}', space=vmem, size = 0x28000, scoped, tag = 'output window, operand 0, single buffered']
    %8 = vsyncpa [#allocation3], 0
    %9 = vsyncpa [#allocation6], 0
    %10 = vsyncpa [#allocation4], 0
    // Predicated region
    $region2: #{tpu_custom_call.1} parent=1 // pred_check
      _
    $region3: #{tpu_custom_call.1} parent=1 // pred_check_branch
      %12 = sbr.rel (0) target = $region5
    $region4: #{tpu_custom_call.1} parent=1 // pred_region
      %s14 = ssub.s32 15360, 15360
      %15 = vsyncadd [#allocation3], %s14
      %s16 = sshll.u32 [#allocation2], 4
      %s17 = int_to_ptr.vmem [resolvable:$true] %s16
      %22 = dma.hbm_to_vmem [thread:$0]  %s0, 15360, %s17, [#allocation3], 640, 640, 40
    $region5: #{tpu_custom_call.1} parent=1 // pred_fallthru
      _
    // Predicated region
    $region6: #{tpu_custom_call.1} parent=1 // pred_check
      _
    $region7: #{tpu_custom_call.1} parent=1 // pred_check_branch
      %24 = sbr.rel (0) target = $region9
    $region8: #{tpu_custom_call.1} parent=1 // pred_region
      %s26 = ssub.s32 2048, 2048
      %27 = vsyncadd [#allocation6], %s26
      %s28 = sshll.u32 [#allocation5], 4
      %s29 = int_to_ptr.vmem [resolvable:$true] %s28
      %34 = dma.hbm_to_vmem [thread:$0]  %s1, 2048, %s29, [#allocation6], 256, 256, 16
    $region9: #{tpu_custom_call.1} parent=1 // pred_fallthru
      _
    // Predicated region
    $region10: #{tpu_custom_call.1} parent=1 // pred_check
      _
    $region11: #{tpu_custom_call.1} parent=1 // pred_check_branch
      %36 = sbr.rel (0) target = $region13
    $region12: #{tpu_custom_call.1} parent=1 // pred_region
      _
    $region13: #{tpu_custom_call.1} parent=1 // pred_fallthru
      _
    // Predicated region
    $region14: #{tpu_custom_call.1} parent=1 // pred_check
      _
    $region15: #{tpu_custom_call.1} parent=1 // pred_check_branch
      %38 = sbr.rel (0) target = $region17
    $region16: #{tpu_custom_call.1} parent=1 // pred_region
      %39 = dma.done [#allocation3], 15360
    $region17: #{tpu_custom_call.1} parent=1 // pred_fallthru
      _
    // Predicated region
    $region18: #{tpu_custom_call.1} parent=1 // pred_check
      _
    $region19: #{tpu_custom_call.1} parent=1 // pred_check_branch
      %41 = sbr.rel (0) target = $region21
    $region20: #{tpu_custom_call.1} parent=1 // pred_region
      %42 = dma.done [#allocation6], 2048
    $region21: #{tpu_custom_call.1} parent=1 // pred_fallthru
      _
    %v43 = vld [vmem:[#allocation5] sm:$0xff]
    %v44 = vld [vmem:[#allocation5 + $0x8] sm:$0xff]
    %v45 = vld [vmem:[#allocation5 + $0x10] sm:$0xff]
    %v46 = vld [vmem:[#allocation5 + $0x18] sm:$0xff]
    %v47 = vld [vmem:[#allocation5 + $0x20] sm:$0xff]
    %v48 = vld [vmem:[#allocation5 + $0x28] sm:$0xff]
    %v49 = vld [vmem:[#allocation5 + $0x30] sm:$0xff]
    %v50 = vld [vmem:[#allocation5 + $0x38] sm:$0xff]
    %v51 = vld [vmem:[#allocation5 + $0x40] sm:$0xff]
    %v52 = vld [vmem:[#allocation5 + $0x48] sm:$0xff]
    %v53 = vld [vmem:[#allocation5 + $0x50] sm:$0xff]
    %v54 = vld [vmem:[#allocation5 + $0x58] sm:$0xff]
    %v55 = vld [vmem:[#allocation5 + $0x60] sm:$0xff]
    %v56 = vld [vmem:[#allocation5 + $0x68] sm:$0xff]
    %v57 = vld [vmem:[#allocation5 + $0x70] sm:$0xff]
    %v58 = vld [vmem:[#allocation5 + $0x78] sm:$0xff]
    %v59 = vld [vmem:[#allocation2] sm:$0xff]
    %v60 = vld [vmem:[#allocation2 + $0x8] sm:$0xff]
    %v61 = vld [vmem:[#allocation2 + $0x10] sm:$0xff]
    %v62 = vld [vmem:[#allocation2 + $0x18] sm:$0xff]
    %v63 = vld [vmem:[#allocation2 + $0x20] sm:$0xff]
    %v64 = vld [vmem:[#allocation2 + $0x28] sm:$0xff]
    %v65 = vld [vmem:[#allocation2 + $0x30] sm:$0xff]
    %v66 = vld [vmem:[#allocation2 + $0x38] sm:$0xff]
    %v67 = vld [vmem:[#allocation2 + $0x40] sm:$0xff]
    %v68 = vld [vmem:[#allocation2 + $0x48] sm:$0xff]
    %v69 = vld [vmem:[#allocation2 + $0x50] sm:$0xff]
    %v70 = vld [vmem:[#allocation2 + $0x58] sm:$0xff]
    %v71 = vld [vmem:[#allocation2 + $0x60] sm:$0xff]
    %v72 = vld [vmem:[#allocation2 + $0x68] sm:$0xff]
    %v73 = vld [vmem:[#allocation2 + $0x70] sm:$0xff]
    %v74 = vld [vmem:[#allocation2 + $0x78] sm:$0xff]
    %v75 = vld [vmem:[#allocation2 + $0x80] sm:$0xff]
    %v76 = vld [vmem:[#allocation2 + $0x88] sm:$0xff]
    %v77 = vld [vmem:[#allocation2 + $0x90] sm:$0xff]
    %v78 = vld [vmem:[#allocation2 + $0x98] sm:$0xff]
    %v79 = vld [vmem:[#allocation2 + $0xa0] sm:$0xff]
    %v80 = vld [vmem:[#allocation2 + $0xa8] sm:$0xff]
    %v81 = vld [vmem:[#allocation2 + $0xb0] sm:$0xff]
    %v82 = vld [vmem:[#allocation2 + $0xb8] sm:$0xff]
    %v83 = vld [vmem:[#allocation2 + $0xc0] sm:$0xff]
    %v84 = vld [vmem:[#allocation2 + $0xc8] sm:$0xff]
    %v85 = vld [vmem:[#allocation2 + $0xd0] sm:$0xff]
    %v86 = vld [vmem:[#allocation2 + $0xd8] sm:$0xff]
    %v87 = vld [vmem:[#allocation2 + $0xe0] sm:$0xff]
    %v88 = vld [vmem:[#allocation2 + $0xe8] sm:$0xff]
    %v89 = vld [vmem:[#allocation2 + $0xf0] sm:$0xff]
    %v90 = vld [vmem:[#allocation2 + $0xf8] sm:$0xff]
    %v91 = vld [vmem:[#allocation2 + $0x100] sm:$0xff]
    %v92 = vld [vmem:[#allocation2 + $0x108] sm:$0xff]
    %v93 = vld [vmem:[#allocation2 + $0x110] sm:$0xff]
    %v94 = vld [vmem:[#allocation2 + $0x118] sm:$0xff]
    %v95 = vld [vmem:[#allocation2 + $0x120] sm:$0xff]
    %v96 = vld [vmem:[#allocation2 + $0x128] sm:$0xff]
    %v97 = vld [vmem:[#allocation2 + $0x130] sm:$0xff]
    %v98 = vld [vmem:[#allocation2 + $0x138] sm:$0xff]
    %v99 = vld [vmem:[#allocation2 + $0x140] sm:$0xff]
    %v100 = vld [vmem:[#allocation2 + $0x148] sm:$0xff]
    %v101 = vld [vmem:[#allocation2 + $0x150] sm:$0xff]
    %v102 = vld [vmem:[#allocation2 + $0x158] sm:$0xff]
    %v103 = vld [vmem:[#allocation2 + $0x160] sm:$0xff]
    %v104 = vld [vmem:[#allocation2 + $0x168] sm:$0xff]
    %v105 = vld [vmem:[#allocation2 + $0x170] sm:$0xff]
    %v106 = vld [vmem:[#allocation2 + $0x178] sm:$0xff]
    %v107 = vld [vmem:[#allocation2 + $0x180] sm:$0xff]
    %v108 = vld [vmem:[#allocation2 + $0x188] sm:$0xff]
    %v109 = vld [vmem:[#allocation2 + $0x190] sm:$0xff]
    %v110 = vld [vmem:[#allocation2 + $0x198] sm:$0xff]
    %v111 = vld [vmem:[#allocation2 + $0x1a0] sm:$0xff]
    %v112 = vld [vmem:[#allocation2 + $0x1a8] sm:$0xff]
    %v113 = vld [vmem:[#allocation2 + $0x1b0] sm:$0xff]
    %v114 = vld [vmem:[#allocation2 + $0x1b8] sm:$0xff]
    %v115 = vld [vmem:[#allocation2 + $0x1c0] sm:$0xff]
    %v116 = vld [vmem:[#allocation2 + $0x1c8] sm:$0xff]
    %v117 = vld [vmem:[#allocation2 + $0x1d0] sm:$0xff]
    %v118 = vld [vmem:[#allocation2 + $0x1d8] sm:$0xff]
    %v119 = vld [vmem:[#allocation2 + $0x1e0] sm:$0xff]
    %v120 = vld [vmem:[#allocation2 + $0x1e8] sm:$0xff]
    %v121 = vld [vmem:[#allocation2 + $0x1f0] sm:$0xff]
    %v122 = vld [vmem:[#allocation2 + $0x1f8] sm:$0xff]
    %v123 = vld [vmem:[#allocation2 + $0x200] sm:$0xff]
    %v124 = vld [vmem:[#allocation2 + $0x208] sm:$0xff]
    %v125 = vld [vmem:[#allocation2 + $0x210] sm:$0xff]
    %v126 = vld [vmem:[#allocation2 + $0x218] sm:$0xff]
    %v127 = vld [vmem:[#allocation2 + $0x220] sm:$0xff]
    %v128 = vld [vmem:[#allocation2 + $0x228] sm:$0xff]
    %v129 = vld [vmem:[#allocation2 + $0x230] sm:$0xff]
    %v130 = vld [vmem:[#allocation2 + $0x238] sm:$0xff]
    %v131 = vld [vmem:[#allocation2 + $0x240] sm:$0xff]
    %v132 = vld [vmem:[#allocation2 + $0x248] sm:$0xff]
    %v133 = vld [vmem:[#allocation2 + $0x250] sm:$0xff]
    %v134 = vld [vmem:[#allocation2 + $0x258] sm:$0xff]
    %v135 = vld [vmem:[#allocation2 + $0x260] sm:$0xff]
    %v136 = vld [vmem:[#allocation2 + $0x268] sm:$0xff]
    %v137 = vld [vmem:[#allocation2 + $0x270] sm:$0xff]
    %v138 = vld [vmem:[#allocation2 + $0x278] sm:$0xff]
    %v139 = vld [vmem:[#allocation2 + $0x280] sm:$0xff]
    %v140 = vld [vmem:[#allocation2 + $0x288] sm:$0xff]
    %v141 = vld [vmem:[#allocation2 + $0x290] sm:$0xff]
    %v142 = vld [vmem:[#allocation2 + $0x298] sm:$0xff]
    %v143 = vld [vmem:[#allocation2 + $0x2a0] sm:$0xff]
    %v144 = vld [vmem:[#allocation2 + $0x2a8] sm:$0xff]
    %v145 = vld [vmem:[#allocation2 + $0x2b0] sm:$0xff]
    %v146 = vld [vmem:[#allocation2 + $0x2b8] sm:$0xff]
    %v147 = vld [vmem:[#allocation2 + $0x2c0] sm:$0xff]
    %v148 = vld [vmem:[#allocation2 + $0x2c8] sm:$0xff]
    %v149 = vld [vmem:[#allocation2 + $0x2d0] sm:$0xff]
    %v150 = vld [vmem:[#allocation2 + $0x2d8] sm:$0xff]
    %v151 = vld [vmem:[#allocation2 + $0x2e0] sm:$0xff]
    %v152 = vld [vmem:[#allocation2 + $0x2e8] sm:$0xff]
    %v153 = vld [vmem:[#allocation2 + $0x2f0] sm:$0xff]
    %v154 = vld [vmem:[#allocation2 + $0x2f8] sm:$0xff]
    %v155 = vld [vmem:[#allocation2 + $0x300] sm:$0xff]
    %v156 = vld [vmem:[#allocation2 + $0x308] sm:$0xff]
    %v157 = vld [vmem:[#allocation2 + $0x310] sm:$0xff]
    %v158 = vld [vmem:[#allocation2 + $0x318] sm:$0xff]
    %v159 = vld [vmem:[#allocation2 + $0x320] sm:$0xff]
    %v160 = vld [vmem:[#allocation2 + $0x328] sm:$0xff]
    %v161 = vld [vmem:[#allocation2 + $0x330] sm:$0xff]
    %v162 = vld [vmem:[#allocation2 + $0x338] sm:$0xff]
    %v163 = vld [vmem:[#allocation2 + $0x340] sm:$0xff]
    %v164 = vld [vmem:[#allocation2 + $0x348] sm:$0xff]
    %v165 = vld [vmem:[#allocation2 + $0x350] sm:$0xff]
    %v166 = vld [vmem:[#allocation2 + $0x358] sm:$0xff]
    %v167 = vld [vmem:[#allocation2 + $0x360] sm:$0xff]
    %v168 = vld [vmem:[#allocation2 + $0x368] sm:$0xff]
    %v169 = vld [vmem:[#allocation2 + $0x370] sm:$0xff]
    %v170 = vld [vmem:[#allocation2 + $0x378] sm:$0xff]
    %v171 = vld [vmem:[#allocation2 + $0x380] sm:$0xff]
    %v172 = vld [vmem:[#allocation2 + $0x388] sm:$0xff]
    %v173 = vld [vmem:[#allocation2 + $0x390] sm:$0xff]
    %v174 = vld [vmem:[#allocation2 + $0x398] sm:$0xff]
    %v175 = vld [vmem:[#allocation2 + $0x3a0] sm:$0xff]
    %v176 = vld [vmem:[#allocation2 + $0x3a8] sm:$0xff]
    %v177 = vld [vmem:[#allocation2 + $0x3b0] sm:$0xff]
    %v178 = vld [vmem:[#allocation2 + $0x3b8] sm:$0xff]
    %vm179 = vcmask 523264
    %v181 = vsel %vm179, %v44, 0
    %v184 = vsel %vm179, %v46, 0
    %v187 = vsel %vm179, %v48, 0
    %v190 = vsel %vm179, %v50, 0
    %v193 = vsel %vm179, %v52, 0
    %v196 = vsel %vm179, %v54, 0
    %v199 = vsel %vm179, %v56, 0
    %v202 = vsel %vm179, %v58, 0
    %204 = vmatprep.subr.mxu0 %v60
    %205 = vmatpush1.msra.mxu0 %v59
    %206 = vmatprep.subr.mxu0 %v65
    %207 = vmatpush1.msra.mxu0 %v64
    %208 = vmatprep.subr.mxu0 %v70
    %209 = vmatpush1.msra.mxu0 %v69
    %210 = vmatprep.subr.mxu0 %v75
    %211 = vmatpush1.msra.mxu0 %v74
    %212 = vmatprep.subr.mxu0 %v80
    %213 = vmatpush1.msra.mxu0 %v79
    %214 = vmatprep.subr.mxu0 %v85
    %215 = vmatpush1.msra.mxu0 %v84
    %216 = vmatprep.subr.mxu0 %v90
    %217 = vmatpush1.msra.mxu0 %v89
    %218 = vmatprep.subr.mxu0 %v95
    %219 = vmatpush1.msra.mxu0 %v94
    %220 = vmatprep.subr.mxu0 %v100
    %221 = vmatpush1.msra.mxu0 %v99
    %222 = vmatprep.subr.mxu0 %v105
    %223 = vmatpush1.msra.mxu0 %v104
    %224 = vmatprep.subr.mxu0 %v110
    %225 = vmatpush1.msra.mxu0 %v109
    %226 = vmatprep.subr.mxu0 %v115
    %227 = vmatpush1.msra.mxu0 %v114
    %228 = vmatprep.subr.mxu0 %v120
    %229 = vmatpush1.msra.mxu0 %v119
    %230 = vmatprep.subr.mxu0 %v125
    %231 = vmatpush1.msra.mxu0 %v124
    %232 = vmatprep.subr.mxu0 %v130
    %233 = vmatpush1.msra.mxu0 %v129
    %234 = vmatprep.subr.mxu0 %v135
    %235 = vmatpush1.msra.mxu0 %v134
    %236 = vmatprep.subr.mxu0 %v140
    %237 = vmatpush1.msra.mxu0 %v139
    %238 = vmatprep.subr.mxu0 %v145
    %239 = vmatpush1.msra.mxu0 %v144
    %240 = vmatprep.subr.mxu0 %v150
    %241 = vmatpush1.msra.mxu0 %v149
    %242 = vmatprep.subr.mxu0 %v155
    %243 = vmatpush1.msra.mxu0 %v154
    %244 = vmatprep.subr.mxu0 %v160
    %245 = vmatpush1.msra.mxu0 %v159
    %246 = vmatprep.subr.mxu0 %v165
    %247 = vmatpush1.msra.mxu0 %v164
    %248 = vmatprep.subr.mxu0 %v170
    %249 = vmatpush1.msra.mxu0 %v169
    %250 = vmatprep.subr.mxu0 %v175
    %251 = vmatpush1.msra.mxu0 %v174
    %252 = vmatprep.subr.mxu0 0.0
    %253 = vmatpush1.msra.mxu0 0.0
    %254 = vmatprep.subr.mxu0 0.0
    %255 = vmatpush1.msra.mxu0 0.0
    %256 = vmatprep.subr.mxu0 0.0
    %257 = vmatpush1.msra.mxu0 0.0
    %258 = vmatprep.subr.mxu0 0.0
    %259 = vmatpush1.msra.mxu0 0.0
    %260 = vmatprep.subr.mxu0 0.0
    %261 = vmatpush1.msra.mxu0 0.0
    %262 = vmatprep.subr.mxu0 0.0
    %263 = vmatpush1.msra.mxu0 0.0
    %264 = vmatprep.subr.mxu0 0.0
    %265 = vmatpush1.msra.mxu0 0.0
    %266 = vmatprep.subr.mxu0 0.0
    %267 = vmatpush1.msra.mxu0 0.0
    %268 = vmatprep.mubr.f32.mxu0 %v181
    %269 = vmatmul.mubr.f32.gmra.mrb[0].mxu0 %v43
    %v270 = vpop.f32.mrb[0].mxu0
    %v271 = vadd.f32 0.0, %v270
    %v272 = vpop.f32.mrb[0].mxu0
    %v273 = vadd.f32 0.0, %v272
    %274 = vmatprep.mubr.f32.mxu0 %v184
    %275 = vmatmul.mubr.f32.gmra.mrb[0].mxu0 %v45
    %v276 = vpop.f32.mrb[0].mxu0
    %v277 = vadd.f32 0.0, %v276
    %v278 = vpop.f32.mrb[0].mxu0
    %v279 = vadd.f32 0.0, %v278
    %280 = vmatprep.mubr.f32.mxu0 %v187
    %281 = vmatmul.mubr.f32.gmra.mrb[0].mxu0 %v47
    %v282 = vpop.f32.mrb[0].mxu0
    %v283 = vadd.f32 0.0, %v282
    %v284 = vpop.f32.mrb[0].mxu0
    %v285 = vadd.f32 0.0, %v284
    %286 = vmatprep.mubr.f32.mxu0 %v190
    %287 = vmatmul.mubr.f32.gmra.mrb[0].mxu0 %v49
    %v288 = vpop.f32.mrb[0].mxu0
    %v289 = vadd.f32 0.0, %v288
    %v290 = vpop.f32.mrb[0].mxu0
    %v291 = vadd.f32 0.0, %v290
    %292 = vmatprep.mubr.f32.mxu0 %v193
    %293 = vmatmul.mubr.f32.gmra.mrb[0].mxu0 %v51
    %v294 = vpop.f32.mrb[0].mxu0
    %v295 = vadd.f32 0.0, %v294
    %v296 = vpop.f32.mrb[0].mxu0
    %v297 = vadd.f32 0.0, %v296
    %298 = vmatprep.mubr.f32.mxu0 %v196
    %299 = vmatmul.mubr.f32.gmra.mrb[0].mxu0 %v53
    %v300 = vpop.f32.mrb[0].mxu0
    %v301 = vadd.f32 0.0, %v300
    %v302 = vpop.f32.mrb[0].mxu0
    %v303 = vadd.f32 0.0, %v302
    %304 = vmatprep.mubr.f32.mxu0 %v199
    %305 = vmatmul.mubr.f32.gmra.mrb[0].mxu0 %v55
    %v306 = vpop.f32.mrb[0].mxu0
    %v307 = vadd.f32 0.0, %v306
    %v308 = vpop.f32.mrb[0].mxu0
    %v309 = vadd.f32 0.0, %v308
    %310 = vmatprep.mubr.f32.mxu0 %v202
    %311 = vmatmul.mubr.f32.gmra.mrb[0].mxu0 %v57
    %v312 = vpop.f32.mrb[0].mxu0
    %v313 = vadd.f32 0.0, %v312
    %v314 = vpop.f32.mrb[0].mxu0
    %v315 = vadd.f32 0.0, %v314
    %316 = vdwg.mxu0
    %317 = vmatprep.subr.mxu0 %v62
    %318 = vmatpush1.msra.mxu0 %v61
    %319 = vmatprep.subr.mxu0 %v67
    %320 = vmatpush1.msra.mxu0 %v66
    %321 = vmatprep.subr.mxu0 %v72
    %322 = vmatpush1.msra.mxu0 %v71
    %323 = vmatprep.subr.mxu0 %v77
    %324 = vmatpush1.msra.mxu0 %v76
    %325 = vmatprep.subr.mxu0 %v82
    %326 = vmatpush1.msra.mxu0 %v81
    %327 = vmatprep.subr.mxu0 %v87
    %328 = vmatpush1.msra.mxu0 %v86
    %329 = vmatprep.subr.mxu0 %v92
    %330 = vmatpush1.msra.mxu0 %v91
    %331 = vmatprep.subr.mxu0 %v97
    %332 = vmatpush1.msra.mxu0 %v96
    %333 = vmatprep.subr.mxu0 %v102
    %334 = vmatpush1.msra.mxu0 %v101
    %335 = vmatprep.subr.mxu0 %v107
    %336 = vmatpush1.msra.mxu0 %v106
    %337 = vmatprep.subr.mxu0 %v112
    %338 = vmatpush1.msra.mxu0 %v111
    %339 = vmatprep.subr.mxu0 %v117
    %340 = vmatpush1.msra.mxu0 %v116
    %341 = vmatprep.subr.mxu0 %v122
    %342 = vmatpush1.msra.mxu0 %v121
    %343 = vmatprep.subr.mxu0 %v127
    %344 = vmatpush1.msra.mxu0 %v126
    %345 = vmatprep.subr.mxu0 %v132
    %346 = vmatpush1.msra.mxu0 %v131
    %347 = vmatprep.subr.mxu0 %v137
    %348 = vmatpush1.msra.mxu0 %v136
    %349 = vmatprep.subr.mxu0 %v142
    %350 = vmatpush1.msra.mxu0 %v141
    %351 = vmatprep.subr.mxu0 %v147
    %352 = vmatpush1.msra.mxu0 %v146
    %353 = vmatprep.subr.mxu0 %v152
    %354 = vmatpush1.msra.mxu0 %v151
    %355 = vmatprep.subr.mxu0 %v157
    %356 = vmatpush1.msra.mxu0 %v156
    %357 = vmatprep.subr.mxu0 %v162
    %358 = vmatpush1.msra.mxu0 %v161
    %359 = vmatprep.subr.mxu0 %v167
    %360 = vmatpush1.msra.mxu0 %v166
    %361 = vmatprep.subr.mxu0 %v172
    %362 = vmatpush1.msra.mxu0 %v171
    %363 = vmatprep.subr.mxu0 %v177
    %364 = vmatpush1.msra.mxu0 %v176
    %365 = vmatprep.subr.mxu0 0.0
    %366 = vmatpush1.msra.mxu0 0.0
    %367 = vmatprep.subr.mxu0 0.0
    %368 = vmatpush1.msra.mxu0 0.0
    %369 = vmatprep.subr.mxu0 0.0
    %370 = vmatpush1.msra.mxu0 0.0
    %371 = vmatprep.subr.mxu0 0.0
    %372 = vmatpush1.msra.mxu0 0.0
    %373 = vmatprep.subr.mxu0 0.0
    %374 = vmatpush1.msra.mxu0 0.0
    %375 = vmatprep.subr.mxu0 0.0
    %376 = vmatpush1.msra.mxu0 0.0
    %377 = vmatprep.subr.mxu0 0.0
    %378 = vmatpush1.msra.mxu0 0.0
    %379 = vmatprep.subr.mxu0 0.0
    %380 = vmatpush1.msra.mxu0 0.0
    %381 = vmatprep.mubr.f32.mxu0 %v181
    %382 = vmatmul.mubr.f32.gmra.mrb[0].mxu0 %v43
    %v383 = vpop.f32.mrb[0].mxu0
    %v384 = vadd.f32 0.0, %v383
    %v385 = vpop.f32.mrb[0].mxu0
    %v386 = vadd.f32 0.0, %v385
    %387 = vmatprep.mubr.f32.mxu0 %v184
    %388 = vmatmul.mubr.f32.gmra.mrb[0].mxu0 %v45
    %v389 = vpop.f32.mrb[0].mxu0
    %v390 = vadd.f32 0.0, %v389
    %v391 = vpop.f32.mrb[0].mxu0
    %v392 = vadd.f32 0.0, %v391
    %393 = vmatprep.mubr.f32.mxu0 %v187
    %394 = vmatmul.mubr.f32.gmra.mrb[0].mxu0 %v47
    %v395 = vpop.f32.mrb[0].mxu0
    %v396 = vadd.f32 0.0, %v395
    %v397 = vpop.f32.mrb[0].mxu0
    %v398 = vadd.f32 0.0, %v397
    %399 = vmatprep.mubr.f32.mxu0 %v190
    %400 = vmatmul.mubr.f32.gmra.mrb[0].mxu0 %v49
    %v401 = vpop.f32.mrb[0].mxu0
    %v402 = vadd.f32 0.0, %v401
    %v403 = vpop.f32.mrb[0].mxu0
    %v404 = vadd.f32 0.0, %v403
    %405 = vmatprep.mubr.f32.mxu0 %v193
    %406 = vmatmul.mubr.f32.gmra.mrb[0].mxu0 %v51
    %v407 = vpop.f32.mrb[0].mxu0
    %v408 = vadd.f32 0.0, %v407
    %v409 = vpop.f32.mrb[0].mxu0
    %v410 = vadd.f32 0.0, %v409
    %411 = vmatprep.mubr.f32.mxu0 %v196
    %412 = vmatmul.mubr.f32.gmra.mrb[0].mxu0 %v53
    %v413 = vpop.f32.mrb[0].mxu0
    %v414 = vadd.f32 0.0, %v413
    %v415 = vpop.f32.mrb[0].mxu0
    %v416 = vadd.f32 0.0, %v415
    %417 = vmatprep.mubr.f32.mxu0 %v199
    %418 = vmatmul.mubr.f32.gmra.mrb[0].mxu0 %v55
    %v419 = vpop.f32.mrb[0].mxu0
    %v420 = vadd.f32 0.0, %v419
    %v421 = vpop.f32.mrb[0].mxu0
    %v422 = vadd.f32 0.0, %v421
    %423 = vmatprep.mubr.f32.mxu0 %v202
    %424 = vmatmul.mubr.f32.gmra.mrb[0].mxu0 %v57
    %v425 = vpop.f32.mrb[0].mxu0
    %v426 = vadd.f32 0.0, %v425
    %v427 = vpop.f32.mrb[0].mxu0
    %v428 = vadd.f32 0.0, %v427
    %429 = vdwg.mxu0
    %430 = vmatprep.subr.mxu0 0.0
    %431 = vmatpush1.msra.mxu0 %v63
    %432 = vmatprep.subr.mxu0 0.0
    %433 = vmatpush1.msra.mxu0 %v68
    %434 = vmatprep.subr.mxu0 0.0
    %435 = vmatpush1.msra.mxu0 %v73
    %436 = vmatprep.subr.mxu0 0.0
    %437 = vmatpush1.msra.mxu0 %v78
    %438 = vmatprep.subr.mxu0 0.0
    %439 = vmatpush1.msra.mxu0 %v83
    %440 = vmatprep.subr.mxu0 0.0
    %441 = vmatpush1.msra.mxu0 %v88
    %442 = vmatprep.subr.mxu0 0.0
    %443 = vmatpush1.msra.mxu0 %v93
    %444 = vmatprep.subr.mxu0 0.0
    %445 = vmatpush1.msra.mxu0 %v98
    %446 = vmatprep.subr.mxu0 0.0
    %447 = vmatpush1.msra.mxu0 %v103
    %448 = vmatprep.subr.mxu0 0.0
    %449 = vmatpush1.msra.mxu0 %v108
    %450 = vmatprep.subr.mxu0 0.0
    %451 = vmatpush1.msra.mxu0 %v113
    %452 = vmatprep.subr.mxu0 0.0
    %453 = vmatpush1.msra.mxu0 %v118
    %454 = vmatprep.subr.mxu0 0.0
    %455 = vmatpush1.msra.mxu0 %v123
    %456 = vmatprep.subr.mxu0 0.0
    %457 = vmatpush1.msra.mxu0 %v128
    %458 = vmatprep.subr.mxu0 0.0
    %459 = vmatpush1.msra.mxu0 %v133
    %460 = vmatprep.subr.mxu0 0.0
    %461 = vmatpush1.msra.mxu0 %v138
    %462 = vmatprep.subr.mxu0 0.0
    %463 = vmatpush1.msra.mxu0 %v143
    %464 = vmatprep.subr.mxu0 0.0
    %465 = vmatpush1.msra.mxu0 %v148
    %466 = vmatprep.subr.mxu0 0.0
    %467 = vmatpush1.msra.mxu0 %v153
    %468 = vmatprep.subr.mxu0 0.0
    %469 = vmatpush1.msra.mxu0 %v158
    %470 = vmatprep.subr.mxu0 0.0
    %471 = vmatpush1.msra.mxu0 %v163
    %472 = vmatprep.subr.mxu0 0.0
    %473 = vmatpush1.msra.mxu0 %v168
    %474 = vmatprep.subr.mxu0 0.0
    %475 = vmatpush1.msra.mxu0 %v173
    %476 = vmatprep.subr.mxu0 0.0
    %477 = vmatpush1.msra.mxu0 %v178
    %478 = vmatprep.subr.mxu0 0.0
    %479 = vmatpush1.msra.mxu0 0.0
    %480 = vmatprep.subr.mxu0 0.0
    %481 = vmatpush1.msra.mxu0 0.0
    %482 = vmatprep.subr.mxu0 0.0
    %483 = vmatpush1.msra.mxu0 0.0
    %484 = vmatprep.subr.mxu0 0.0
    %485 = vmatpush1.msra.mxu0 0.0
    %486 = vmatprep.subr.mxu0 0.0
    %487 = vmatpush1.msra.mxu0 0.0
    %488 = vmatprep.subr.mxu0 0.0
    %489 = vmatpush1.msra.mxu0 0.0
    %490 = vmatprep.subr.mxu0 0.0
    %491 = vmatpush1.msra.mxu0 0.0
    %492 = vmatprep.subr.mxu0 0.0
    %493 = vmatpush1.msra.mxu0 0.0
    %494 = vmatprep.mubr.f32.mxu0 %v181
    %495 = vmatmul.mubr.f32.gmra.mrb[0].mxu0 %v43
    %v496 = vpop.f32.mrb[0].mxu0
    %v497 = vadd.f32 0.0, %v496
    %v498 = vpop.f32.mrb[0].mxu0
    %499 = vmatprep.mubr.f32.mxu0 %v184
    %500 = vmatmul.mubr.f32.gmra.mrb[0].mxu0 %v45
    %v501 = vpop.f32.mrb[0].mxu0
    %v502 = vadd.f32 0.0, %v501
    %v503 = vpop.f32.mrb[0].mxu0
    %504 = vmatprep.mubr.f32.mxu0 %v187
    %505 = vmatmul.mubr.f32.gmra.mrb[0].mxu0 %v47
    %v506 = vpop.f32.mrb[0].mxu0
    %v507 = vadd.f32 0.0, %v506
    %v508 = vpop.f32.mrb[0].mxu0
    %509 = vmatprep.mubr.f32.mxu0 %v190
    %510 = vmatmul.mubr.f32.gmra.mrb[0].mxu0 %v49
    %v511 = vpop.f32.mrb[0].mxu0
    %v512 = vadd.f32 0.0, %v511
    %v513 = vpop.f32.mrb[0].mxu0
    %514 = vmatprep.mubr.f32.mxu0 %v193
    %515 = vmatmul.mubr.f32.gmra.mrb[0].mxu0 %v51
    %v516 = vpop.f32.mrb[0].mxu0
    %v517 = vadd.f32 0.0, %v516
    %v518 = vpop.f32.mrb[0].mxu0
    %519 = vmatprep.mubr.f32.mxu0 %v196
    %520 = vmatmul.mubr.f32.gmra.mrb[0].mxu0 %v53
    %v521 = vpop.f32.mrb[0].mxu0
    %v522 = vadd.f32 0.0, %v521
    %v523 = vpop.f32.mrb[0].mxu0
    %524 = vmatprep.mubr.f32.mxu0 %v199
    %525 = vmatmul.mubr.f32.gmra.mrb[0].mxu0 %v55
    %v526 = vpop.f32.mrb[0].mxu0
    %v527 = vadd.f32 0.0, %v526
    %v528 = vpop.f32.mrb[0].mxu0
    %529 = vmatprep.mubr.f32.mxu0 %v202
    %530 = vmatmul.mubr.f32.gmra.mrb[0].mxu0 %v57
    %v531 = vpop.f32.mrb[0].mxu0
    %v532 = vadd.f32 0.0, %v531
    %v533 = vpop.f32.mrb[0].mxu0
    %534 = vdwg.mxu0
    %vm535 = vcmask 924672
    %v537 = vsel %vm535, %v497, 0
    %v540 = vsel %vm535, %v502, 0
    %v543 = vsel %vm535, %v507, 0
    %v546 = vsel %vm535, %v512, 0
    %v549 = vsel %vm535, %v517, 0
    %v552 = vsel %vm535, %v522, 0
    %v555 = vsel %vm535, %v527, 0
    %v558 = vsel %vm535, %v532, 0
    %vm560 = vcmask 1040384
    %v562 = vsel %vm560, 1.0, 0
    %564 = vmatprep.subr.mxu0 0.0
    %565 = vmatpush1.msra.mxu0 1.0
    %566 = vmatprep.subr.mxu0 0.0
    %567 = vmatpush1.msra.mxu0 1.0
    %568 = vmatprep.subr.mxu0 0.0
    %569 = vmatpush1.msra.mxu0 1.0
    %570 = vmatprep.subr.mxu0 0.0
    %571 = vmatpush1.msra.mxu0 1.0
    %572 = vmatprep.subr.mxu0 0.0
    %573 = vmatpush1.msra.mxu0 1.0
    %574 = vmatprep.subr.mxu0 0.0
    %575 = vmatpush1.msra.mxu0 1.0
    %576 = vmatprep.subr.mxu0 0.0
    %577 = vmatpush1.msra.mxu0 1.0
    %578 = vmatprep.subr.mxu0 0.0
    %579 = vmatpush1.msra.mxu0 1.0
    %580 = vmatprep.subr.mxu0 0.0
    %581 = vmatpush1.msra.mxu0 1.0
    %582 = vmatprep.subr.mxu0 0.0
    %583 = vmatpush1.msra.mxu0 1.0
    %584 = vmatprep.subr.mxu0 0.0
    %585 = vmatpush1.msra.mxu0 1.0
    %586 = vmatprep.subr.mxu0 0.0
    %587 = vmatpush1.msra.mxu0 1.0
    %588 = vmatprep.subr.mxu0 0.0
    %589 = vmatpush1.msra.mxu0 1.0
    %590 = vmatprep.subr.mxu0 0.0
    %591 = vmatpush1.msra.mxu0 1.0
    %592 = vmatprep.subr.mxu0 0.0
    %593 = vmatpush1.msra.mxu0 1.0
    %594 = vmatprep.subr.mxu0 0.0
    %595 = vmatpush1.msra.mxu0 1.0
    %596 = vmatprep.subr.mxu0 0.0
    %597 = vmatpush1.msra.mxu0 1.0
    %598 = vmatprep.subr.mxu0 0.0
    %599 = vmatpush1.msra.mxu0 1.0
    %600 = vmatprep.subr.mxu0 0.0
    %601 = vmatpush1.msra.mxu0 1.0
    %602 = vmatprep.subr.mxu0 0.0
    %603 = vmatpush1.msra.mxu0 1.0
    %604 = vmatprep.subr.mxu0 0.0
    %605 = vmatpush1.msra.mxu0 1.0
    %606 = vmatprep.subr.mxu0 0.0
    %607 = vmatpush1.msra.mxu0 1.0
    %608 = vmatprep.subr.mxu0 0.0
    %609 = vmatpush1.msra.mxu0 1.0
    %610 = vmatprep.subr.mxu0 0.0
    %611 = vmatpush1.msra.mxu0 1.0
    %612 = vmatprep.subr.mxu0 0.0
    %613 = vmatpush1.msra.mxu0 1.0
    %614 = vmatprep.subr.mxu0 0.0
    %615 = vmatpush1.msra.mxu0 1.0
    %616 = vmatprep.subr.mxu0 0.0
    %617 = vmatpush1.msra.mxu0 1.0
    %618 = vmatprep.subr.mxu0 0.0
    %619 = vmatpush1.msra.mxu0 1.0
    %620 = vmatprep.subr.mxu0 0.0
    %621 = vmatpush1.msra.mxu0 1.0
    %622 = vmatprep.subr.mxu0 0.0
    %623 = vmatpush1.msra.mxu0 1.0
    %624 = vmatprep.subr.mxu0 0.0
    %625 = vmatpush1.msra.mxu0 1.0
    %626 = vmatprep.subr.mxu0 0.0
    %627 = vmatpush1.msra.mxu0 1.0
    %628 = vmatprep.mubr.f32.mxu0 %v273
    %629 = vmatmul.mubr.f32.gmra.mrb[0].mxu0 %v271
    %v630 = vpop.f32.mrb[0].mxu0
    %v631 = vadd.f32 0.0, %v630
    %v632 = vpop.f32.mrb[0].mxu0
    %633 = vmatprep.mubr.f32.mxu0 %v279
    %634 = vmatmul.mubr.f32.gmra.mrb[0].mxu0 %v277
    %v635 = vpop.f32.mrb[0].mxu0
    %v636 = vadd.f32 0.0, %v635
    %v637 = vpop.f32.mrb[0].mxu0
    %638 = vmatprep.mubr.f32.mxu0 %v285
    %639 = vmatmul.mubr.f32.gmra.mrb[0].mxu0 %v283
    %v640 = vpop.f32.mrb[0].mxu0
    %v641 = vadd.f32 0.0, %v640
    %v642 = vpop.f32.mrb[0].mxu0
    %643 = vmatprep.mubr.f32.mxu0 %v291
    %644 = vmatmul.mubr.f32.gmra.mrb[0].mxu0 %v289
    %v645 = vpop.f32.mrb[0].mxu0
    %v646 = vadd.f32 0.0, %v645
    %v647 = vpop.f32.mrb[0].mxu0
    %648 = vmatprep.mubr.f32.mxu0 %v297
    %649 = vmatmul.mubr.f32.gmra.mrb[0].mxu0 %v295
    %v650 = vpop.f32.mrb[0].mxu0
    %v651 = vadd.f32 0.0, %v650
    %v652 = vpop.f32.mrb[0].mxu0
    %653 = vmatprep.mubr.f32.mxu0 %v303
    %654 = vmatmul.mubr.f32.gmra.mrb[0].mxu0 %v301
    %v655 = vpop.f32.mrb[0].mxu0
    %v656 = vadd.f32 0.0, %v655
    %v657 = vpop.f32.mrb[0].mxu0
    %658 = vmatprep.mubr.f32.mxu0 %v309
    %659 = vmatmul.mubr.f32.gmra.mrb[0].mxu0 %v307
    %v660 = vpop.f32.mrb[0].mxu0
    %v661 = vadd.f32 0.0, %v660
    %v662 = vpop.f32.mrb[0].mxu0
    %663 = vmatprep.mubr.f32.mxu0 %v315
    %664 = vmatmul.mubr.f32.gmra.mrb[0].mxu0 %v313
    %v665 = vpop.f32.mrb[0].mxu0
    %v666 = vadd.f32 0.0, %v665
    %v667 = vpop.f32.mrb[0].mxu0
    %668 = vdwg.mxu0
    %669 = vmatprep.subr.mxu0 0.0
    %670 = vmatpush1.msra.mxu0 1.0
    %671 = vmatprep.subr.mxu0 0.0
    %672 = vmatpush1.msra.mxu0 1.0
    %673 = vmatprep.subr.mxu0 0.0
    %674 = vmatpush1.msra.mxu0 1.0
    %675 = vmatprep.subr.mxu0 0.0
    %676 = vmatpush1.msra.mxu0 1.0
    %677 = vmatprep.subr.mxu0 0.0
    %678 = vmatpush1.msra.mxu0 1.0
    %679 = vmatprep.subr.mxu0 0.0
    %680 = vmatpush1.msra.mxu0 1.0
    %681 = vmatprep.subr.mxu0 0.0
    %682 = vmatpush1.msra.mxu0 1.0
    %683 = vmatprep.subr.mxu0 0.0
    %684 = vmatpush1.msra.mxu0 1.0
    %685 = vmatprep.subr.mxu0 0.0
    %686 = vmatpush1.msra.mxu0 1.0
    %687 = vmatprep.subr.mxu0 0.0
    %688 = vmatpush1.msra.mxu0 1.0
    %689 = vmatprep.subr.mxu0 0.0
    %690 = vmatpush1.msra.mxu0 1.0
    %691 = vmatprep.subr.mxu0 0.0
    %692 = vmatpush1.msra.mxu0 1.0
    %693 = vmatprep.subr.mxu0 0.0
    %694 = vmatpush1.msra.mxu0 1.0
    %695 = vmatprep.subr.mxu0 0.0
    %696 = vmatpush1.msra.mxu0 1.0
    %697 = vmatprep.subr.mxu0 0.0
    %698 = vmatpush1.msra.mxu0 1.0
    %699 = vmatprep.subr.mxu0 0.0
    %700 = vmatpush1.msra.mxu0 1.0
    %701 = vmatprep.subr.mxu0 0.0
    %702 = vmatpush1.msra.mxu0 1.0
    %703 = vmatprep.subr.mxu0 0.0
    %704 = vmatpush1.msra.mxu0 1.0
    %705 = vmatprep.subr.mxu0 0.0
    %706 = vmatpush1.msra.mxu0 1.0
    %707 = vmatprep.subr.mxu0 0.0
    %708 = vmatpush1.msra.mxu0 1.0
    %709 = vmatprep.subr.mxu0 0.0
    %710 = vmatpush1.msra.mxu0 1.0
    %711 = vmatprep.subr.mxu0 0.0
    %712 = vmatpush1.msra.mxu0 1.0
    %713 = vmatprep.subr.mxu0 0.0
    %714 = vmatpush1.msra.mxu0 1.0
    %715 = vmatprep.subr.mxu0 0.0
    %716 = vmatpush1.msra.mxu0 1.0
    %717 = vmatprep.subr.mxu0 0.0
    %718 = vmatpush1.msra.mxu0 1.0
    %719 = vmatprep.subr.mxu0 0.0
    %720 = vmatpush1.msra.mxu0 1.0
    %721 = vmatprep.subr.mxu0 0.0
    %722 = vmatpush1.msra.mxu0 1.0
    %723 = vmatprep.subr.mxu0 0.0
    %724 = vmatpush1.msra.mxu0 1.0
    %725 = vmatprep.subr.mxu0 0.0
    %726 = vmatpush1.msra.mxu0 1.0
    %727 = vmatprep.subr.mxu0 0.0
    %728 = vmatpush1.msra.mxu0 1.0
    %729 = vmatprep.subr.mxu0 0.0
    %730 = vmatpush1.msra.mxu0 1.0
    %731 = vmatprep.subr.mxu0 0.0
    %732 = vmatpush1.msra.mxu0 1.0
    %733 = vmatprep.mubr.f32.mxu0 %v386
    %734 = vmatmul.mubr.f32.gmra.mrb[0].mxu0 %v384
    %v735 = vpop.f32.mrb[0].mxu0
    %v736 = vadd.f32 %v631, %v735
    %v737 = vpop.f32.mrb[0].mxu0
    %738 = vmatprep.mubr.f32.mxu0 %v392
    %739 = vmatmul.mubr.f32.gmra.mrb[0].mxu0 %v390
    %v740 = vpop.f32.mrb[0].mxu0
    %v741 = vadd.f32 %v636, %v740
    %v742 = vpop.f32.mrb[0].mxu0
    %743 = vmatprep.mubr.f32.mxu0 %v398
    %744 = vmatmul.mubr.f32.gmra.mrb[0].mxu0 %v396
    %v745 = vpop.f32.mrb[0].mxu0
    %v746 = vadd.f32 %v641, %v745
    %v747 = vpop.f32.mrb[0].mxu0
    %748 = vmatprep.mubr.f32.mxu0 %v404
    %749 = vmatmul.mubr.f32.gmra.mrb[0].mxu0 %v402
    %v750 = vpop.f32.mrb[0].mxu0
    %v751 = vadd.f32 %v646, %v750
    %v752 = vpop.f32.mrb[0].mxu0
    %753 = vmatprep.mubr.f32.mxu0 %v410
    %754 = vmatmul.mubr.f32.gmra.mrb[0].mxu0 %v408
    %v755 = vpop.f32.mrb[0].mxu0
    %v756 = vadd.f32 %v651, %v755
    %v757 = vpop.f32.mrb[0].mxu0
    %758 = vmatprep.mubr.f32.mxu0 %v416
    %759 = vmatmul.mubr.f32.gmra.mrb[0].mxu0 %v414
    %v760 = vpop.f32.mrb[0].mxu0
    %v761 = vadd.f32 %v656, %v760
    %v762 = vpop.f32.mrb[0].mxu0
    %763 = vmatprep.mubr.f32.mxu0 %v422
    %764 = vmatmul.mubr.f32.gmra.mrb[0].mxu0 %v420
    %v765 = vpop.f32.mrb[0].mxu0
    %v766 = vadd.f32 %v661, %v765
    %v767 = vpop.f32.mrb[0].mxu0
    %768 = vmatprep.mubr.f32.mxu0 %v428
    %769 = vmatmul.mubr.f32.gmra.mrb[0].mxu0 %v426
    %v770 = vpop.f32.mrb[0].mxu0
    %v771 = vadd.f32 %v666, %v770
    %v772 = vpop.f32.mrb[0].mxu0
    %773 = vdwg.mxu0
    %774 = vmatprep.subr.mxu0 0.0
    %775 = vmatpush1.msra.mxu0 1.0
    %776 = vmatprep.subr.mxu0 0.0
    %777 = vmatpush1.msra.mxu0 1.0
    %778 = vmatprep.subr.mxu0 0.0
    %779 = vmatpush1.msra.mxu0 1.0
    %780 = vmatprep.subr.mxu0 0.0
    %781 = vmatpush1.msra.mxu0 1.0
    %782 = vmatprep.subr.mxu0 0.0
    %783 = vmatpush1.msra.mxu0 1.0
    %784 = vmatprep.subr.mxu0 0.0
    %785 = vmatpush1.msra.mxu0 1.0
    %786 = vmatprep.subr.mxu0 0.0
    %787 = vmatpush1.msra.mxu0 1.0
    %788 = vmatprep.subr.mxu0 0.0
    %789 = vmatpush1.msra.mxu0 1.0
    %790 = vmatprep.subr.mxu0 0.0
    %791 = vmatpush1.msra.mxu0 1.0
    %792 = vmatprep.subr.mxu0 0.0
    %793 = vmatpush1.msra.mxu0 1.0
    %794 = vmatprep.subr.mxu0 0.0
    %795 = vmatpush1.msra.mxu0 1.0
    %796 = vmatprep.subr.mxu0 0.0
    %797 = vmatpush1.msra.mxu0 1.0
    %798 = vmatprep.subr.mxu0 0.0
    %799 = vmatpush1.msra.mxu0 1.0
    %800 = vmatprep.subr.mxu0 0.0
    %801 = vmatpush1.msra.mxu0 1.0
    %802 = vmatprep.subr.mxu0 0.0
    %803 = vmatpush1.msra.mxu0 %v562
    %804 = vmatprep.subr.mxu0 0.0
    %805 = vmatpush1.msra.mxu0 0.0
    %806 = vmatprep.subr.mxu0 0.0
    %807 = vmatpush1.msra.mxu0 0.0
    %808 = vmatprep.subr.mxu0 0.0
    %809 = vmatpush1.msra.mxu0 0.0
    %810 = vmatprep.subr.mxu0 0.0
    %811 = vmatpush1.msra.mxu0 0.0
    %812 = vmatprep.subr.mxu0 0.0
    %813 = vmatpush1.msra.mxu0 0.0
    %814 = vmatprep.subr.mxu0 0.0
    %815 = vmatpush1.msra.mxu0 0.0
    %816 = vmatprep.subr.mxu0 0.0
    %817 = vmatpush1.msra.mxu0 0.0
    %818 = vmatprep.subr.mxu0 0.0
    %819 = vmatpush1.msra.mxu0 0.0
    %820 = vmatprep.subr.mxu0 0.0
    %821 = vmatpush1.msra.mxu0 0.0
    %822 = vmatprep.subr.mxu0 0.0
    %823 = vmatpush1.msra.mxu0 0.0
    %824 = vmatprep.subr.mxu0 0.0
    %825 = vmatpush1.msra.mxu0 0.0
    %826 = vmatprep.subr.mxu0 0.0
    %827 = vmatpush1.msra.mxu0 0.0
    %828 = vmatprep.subr.mxu0 0.0
    %829 = vmatpush1.msra.mxu0 0.0
    %830 = vmatprep.subr.mxu0 0.0
    %831 = vmatpush1.msra.mxu0 0.0
    %832 = vmatprep.subr.mxu0 0.0
    %833 = vmatpush1.msra.mxu0 0.0
    %834 = vmatprep.subr.mxu0 0.0
    %835 = vmatpush1.msra.mxu0 0.0
    %836 = vmatprep.subr.mxu0 0.0
    %837 = vmatpush1.msra.mxu0 0.0
    %838 = vmatprep.mubr.f32.mxu0 0.0
    %839 = vmatmul.mubr.f32.gmra.mrb[0].mxu0 %v537
    %v840 = vpop.f32.mrb[0].mxu0
    %v841 = vadd.f32 %v736, %v840
    %v842 = vpop.f32.mrb[0].mxu0
    %843 = vmatprep.mubr.f32.mxu0 0.0
    %844 = vmatmul.mubr.f32.gmra.mrb[0].mxu0 %v540
    %v845 = vpop.f32.mrb[0].mxu0
    %v846 = vadd.f32 %v741, %v845
    %v847 = vpop.f32.mrb[0].mxu0
    %848 = vmatprep.mubr.f32.mxu0 0.0
    %849 = vmatmul.mubr.f32.gmra.mrb[0].mxu0 %v543
    %v850 = vpop.f32.mrb[0].mxu0
    %v851 = vadd.f32 %v746, %v850
    %v852 = vpop.f32.mrb[0].mxu0
    %853 = vmatprep.mubr.f32.mxu0 0.0
    %854 = vmatmul.mubr.f32.gmra.mrb[0].mxu0 %v546
    %v855 = vpop.f32.mrb[0].mxu0
    %v856 = vadd.f32 %v751, %v855
    %v857 = vpop.f32.mrb[0].mxu0
    %858 = vmatprep.mubr.f32.mxu0 0.0
    %859 = vmatmul.mubr.f32.gmra.mrb[0].mxu0 %v549
    %v860 = vpop.f32.mrb[0].mxu0
    %v861 = vadd.f32 %v756, %v860
    %v862 = vpop.f32.mrb[0].mxu0
    %863 = vmatprep.mubr.f32.mxu0 0.0
    %864 = vmatmul.mubr.f32.gmra.mrb[0].mxu0 %v552
    %v865 = vpop.f32.mrb[0].mxu0
    %v866 = vadd.f32 %v761, %v865
    %v867 = vpop.f32.mrb[0].mxu0
    %868 = vmatprep.mubr.f32.mxu0 0.0
    %869 = vmatmul.mubr.f32.gmra.mrb[0].mxu0 %v555
    %v870 = vpop.f32.mrb[0].mxu0
    %v871 = vadd.f32 %v766, %v870
    %v872 = vpop.f32.mrb[0].mxu0
    %873 = vmatprep.mubr.f32.mxu0 0.0
    %874 = vmatmul.mubr.f32.gmra.mrb[0].mxu0 %v558
    %v875 = vpop.f32.mrb[0].mxu0
    %v876 = vadd.f32 %v771, %v875
    %v877 = vpop.f32.mrb[0].mxu0
    %878 = vdwg.mxu0
    %v879 = vmul.f32 %v271, %v271
    %v880 = vmul.f32 %v273, %v273
    %v881 = vmul.f32 %v384, %v384
    %v882 = vmul.f32 %v386, %v386
    %v883 = vmul.f32 %v497, %v497
    %v884 = vmul.f32 %v277, %v277
    %v885 = vmul.f32 %v279, %v279
    %v886 = vmul.f32 %v390, %v390
    %v887 = vmul.f32 %v392, %v392
    %v888 = vmul.f32 %v502, %v502
    %v889 = vmul.f32 %v283, %v283
    %v890 = vmul.f32 %v285, %v285
    %v891 = vmul.f32 %v396, %v396
    %v892 = vmul.f32 %v398, %v398
    %v893 = vmul.f32 %v507, %v507
    %v894 = vmul.f32 %v289, %v289
    %v895 = vmul.f32 %v291, %v291
    %v896 = vmul.f32 %v402, %v402
    %v897 = vmul.f32 %v404, %v404
    %v898 = vmul.f32 %v512, %v512
    %v899 = vmul.f32 %v295, %v295
    %v900 = vmul.f32 %v297, %v297
    %v901 = vmul.f32 %v408, %v408
    %v902 = vmul.f32 %v410, %v410
    %v903 = vmul.f32 %v517, %v517
    %v904 = vmul.f32 %v301, %v301
    %v905 = vmul.f32 %v303, %v303
    %v906 = vmul.f32 %v414, %v414
    %v907 = vmul.f32 %v416, %v416
    %v908 = vmul.f32 %v522, %v522
    %v909 = vmul.f32 %v307, %v307
    %v910 = vmul.f32 %v309, %v309
    %v911 = vmul.f32 %v420, %v420
    %v912 = vmul.f32 %v422, %v422
    %v913 = vmul.f32 %v527, %v527
    %v914 = vmul.f32 %v313, %v313
    %v915 = vmul.f32 %v315, %v315
    %v916 = vmul.f32 %v426, %v426
    %v917 = vmul.f32 %v428, %v428
    %v918 = vmul.f32 %v532, %v532
    %v920 = vsel %vm535, %v883, 0
    %v923 = vsel %vm535, %v888, 0
    %v926 = vsel %vm535, %v893, 0
    %v929 = vsel %vm535, %v898, 0
    %v932 = vsel %vm535, %v903, 0
    %v935 = vsel %vm535, %v908, 0
    %v938 = vsel %vm535, %v913, 0
    %v941 = vsel %vm535, %v918, 0
    %943 = vmatprep.subr.mxu0 0.0
    %944 = vmatpush1.msra.mxu0 1.0
    %945 = vmatprep.subr.mxu0 0.0
    %946 = vmatpush1.msra.mxu0 1.0
    %947 = vmatprep.subr.mxu0 0.0
    %948 = vmatpush1.msra.mxu0 1.0
    %949 = vmatprep.subr.mxu0 0.0
    %950 = vmatpush1.msra.mxu0 1.0
    %951 = vmatprep.subr.mxu0 0.0
    %952 = vmatpush1.msra.mxu0 1.0
    %953 = vmatprep.subr.mxu0 0.0
    %954 = vmatpush1.msra.mxu0 1.0
    %955 = vmatprep.subr.mxu0 0.0
    %956 = vmatpush1.msra.mxu0 1.0
    %957 = vmatprep.subr.mxu0 0.0
    %958 = vmatpush1.msra.mxu0 1.0
    %959 = vmatprep.subr.mxu0 0.0
    %960 = vmatpush1.msra.mxu0 1.0
    %961 = vmatprep.subr.mxu0 0.0
    %962 = vmatpush1.msra.mxu0 1.0
    %963 = vmatprep.subr.mxu0 0.0
    %964 = vmatpush1.msra.mxu0 1.0
    %965 = vmatprep.subr.mxu0 0.0
    %966 = vmatpush1.msra.mxu0 1.0
    %967 = vmatprep.subr.mxu0 0.0
    %968 = vmatpush1.msra.mxu0 1.0
    %969 = vmatprep.subr.mxu0 0.0
    %970 = vmatpush1.msra.mxu0 1.0
    %971 = vmatprep.subr.mxu0 0.0
    %972 = vmatpush1.msra.mxu0 1.0
    %973 = vmatprep.subr.mxu0 0.0
    %974 = vmatpush1.msra.mxu0 1.0
    %975 = vmatprep.subr.mxu0 0.0
    %976 = vmatpush1.msra.mxu0 1.0
    %977 = vmatprep.subr.mxu0 0.0
    %978 = vmatpush1.msra.mxu0 1.0
    %979 = vmatprep.subr.mxu0 0.0
    %980 = vmatpush1.msra.mxu0 1.0
    %981 = vmatprep.subr.mxu0 0.0
    %982 = vmatpush1.msra.mxu0 1.0
    %983 = vmatprep.subr.mxu0 0.0
    %984 = vmatpush1.msra.mxu0 1.0
    %985 = vmatprep.subr.mxu0 0.0
    %986 = vmatpush1.msra.mxu0 1.0
    %987 = vmatprep.subr.mxu0 0.0
    %988 = vmatpush1.msra.mxu0 1.0
    %989 = vmatprep.subr.mxu0 0.0
    %990 = vmatpush1.msra.mxu0 1.0
    %991 = vmatprep.subr.mxu0 0.0
    %992 = vmatpush1.msra.mxu0 1.0
    %993 = vmatprep.subr.mxu0 0.0
    %994 = vmatpush1.msra.mxu0 1.0
    %995 = vmatprep.subr.mxu0 0.0
    %996 = vmatpush1.msra.mxu0 1.0
    %997 = vmatprep.subr.mxu0 0.0
    %998 = vmatpush1.msra.mxu0 1.0
    %999 = vmatprep.subr.mxu0 0.0
    %1000 = vmatpush1.msra.mxu0 1.0
    %1001 = vmatprep.subr.mxu0 0.0
    %1002 = vmatpush1.msra.mxu0 1.0
    %1003 = vmatprep.subr.mxu0 0.0
    %1004 = vmatpush1.msra.mxu0 1.0
    %1005 = vmatprep.subr.mxu0 0.0
    %1006 = vmatpush1.msra.mxu0 1.0
    %1007 = vmatprep.mubr.f32.mxu0 %v880
    %1008 = vmatmul.mubr.f32.gmra.mrb[0].mxu0 %v879
    %v1009 = vpop.f32.mrb[0].mxu0
    %v1010 = vadd.f32 0.0, %v1009
    %v1011 = vpop.f32.mrb[0].mxu0
    %1012 = vmatprep.mubr.f32.mxu0 %v885
    %1013 = vmatmul.mubr.f32.gmra.mrb[0].mxu0 %v884
    %v1014 = vpop.f32.mrb[0].mxu0
    %v1015 = vadd.f32 0.0, %v1014
    %v1016 = vpop.f32.mrb[0].mxu0
    %1017 = vmatprep.mubr.f32.mxu0 %v890
    %1018 = vmatmul.mubr.f32.gmra.mrb[0].mxu0 %v889
    %v1019 = vpop.f32.mrb[0].mxu0
    %v1020 = vadd.f32 0.0, %v1019
    %v1021 = vpop.f32.mrb[0].mxu0
    %1022 = vmatprep.mubr.f32.mxu0 %v895
    %1023 = vmatmul.mubr.f32.gmra.mrb[0].mxu0 %v894
    %v1024 = vpop.f32.mrb[0].mxu0
    %v1025 = vadd.f32 0.0, %v1024
    %v1026 = vpop.f32.mrb[0].mxu0
    %1027 = vmatprep.mubr.f32.mxu0 %v900
    %1028 = vmatmul.mubr.f32.gmra.mrb[0].mxu0 %v899
    %v1029 = vpop.f32.mrb[0].mxu0
    %v1030 = vadd.f32 0.0, %v1029
    %v1031 = vpop.f32.mrb[0].mxu0
    %1032 = vmatprep.mubr.f32.mxu0 %v905
    %1033 = vmatmul.mubr.f32.gmra.mrb[0].mxu0 %v904
    %v1034 = vpop.f32.mrb[0].mxu0
    %v1035 = vadd.f32 0.0, %v1034
    %v1036 = vpop.f32.mrb[0].mxu0
    %1037 = vmatprep.mubr.f32.mxu0 %v910
    %1038 = vmatmul.mubr.f32.gmra.mrb[0].mxu0 %v909
    %v1039 = vpop.f32.mrb[0].mxu0
    %v1040 = vadd.f32 0.0, %v1039
    %v1041 = vpop.f32.mrb[0].mxu0
    %1042 = vmatprep.mubr.f32.mxu0 %v915
    %1043 = vmatmul.mubr.f32.gmra.mrb[0].mxu0 %v914
    %v1044 = vpop.f32.mrb[0].mxu0
    %v1045 = vadd.f32 0.0, %v1044
    %v1046 = vpop.f32.mrb[0].mxu0
    %1047 = vdwg.mxu0
    %1048 = vmatprep.subr.mxu0 0.0
    %1049 = vmatpush1.msra.mxu0 1.0
    %1050 = vmatprep.subr.mxu0 0.0
    %1051 = vmatpush1.msra.mxu0 1.0
    %1052 = vmatprep.subr.mxu0 0.0
    %1053 = vmatpush1.msra.mxu0 1.0
    %1054 = vmatprep.subr.mxu0 0.0
    %1055 = vmatpush1.msra.mxu0 1.0
    %1056 = vmatprep.subr.mxu0 0.0
    %1057 = vmatpush1.msra.mxu0 1.0
    %1058 = vmatprep.subr.mxu0 0.0
    %1059 = vmatpush1.msra.mxu0 1.0
    %1060 = vmatprep.subr.mxu0 0.0
    %1061 = vmatpush1.msra.mxu0 1.0
    %1062 = vmatprep.subr.mxu0 0.0
    %1063 = vmatpush1.msra.mxu0 1.0
    %1064 = vmatprep.subr.mxu0 0.0
    %1065 = vmatpush1.msra.mxu0 1.0
    %1066 = vmatprep.subr.mxu0 0.0
    %1067 = vmatpush1.msra.mxu0 1.0
    %1068 = vmatprep.subr.mxu0 0.0
    %1069 = vmatpush1.msra.mxu0 1.0
    %1070 = vmatprep.subr.mxu0 0.0
    %1071 = vmatpush1.msra.mxu0 1.0
    %1072 = vmatprep.subr.mxu0 0.0
    %1073 = vmatpush1.msra.mxu0 1.0
    %1074 = vmatprep.subr.mxu0 0.0
    %1075 = vmatpush1.msra.mxu0 1.0
    %1076 = vmatprep.subr.mxu0 0.0
    %1077 = vmatpush1.msra.mxu0 1.0
    %1078 = vmatprep.subr.mxu0 0.0
    %1079 = vmatpush1.msra.mxu0 1.0
    %1080 = vmatprep.subr.mxu0 0.0
    %1081 = vmatpush1.msra.mxu0 1.0
    %1082 = vmatprep.subr.mxu0 0.0
    %1083 = vmatpush1.msra.mxu0 1.0
    %1084 = vmatprep.subr.mxu0 0.0
    %1085 = vmatpush1.msra.mxu0 1.0
    %1086 = vmatprep.subr.mxu0 0.0
    %1087 = vmatpush1.msra.mxu0 1.0
    %1088 = vmatprep.subr.mxu0 0.0
    %1089 = vmatpush1.msra.mxu0 1.0
    %1090 = vmatprep.subr.mxu0 0.0
    %1091 = vmatpush1.msra.mxu0 1.0
    %1092 = vmatprep.subr.mxu0 0.0
    %1093 = vmatpush1.msra.mxu0 1.0
    %1094 = vmatprep.subr.mxu0 0.0
    %1095 = vmatpush1.msra.mxu0 1.0
    %1096 = vmatprep.subr.mxu0 0.0
    %1097 = vmatpush1.msra.mxu0 1.0
    %1098 = vmatprep.subr.mxu0 0.0
    %1099 = vmatpush1.msra.mxu0 1.0
    %1100 = vmatprep.subr.mxu0 0.0
    %1101 = vmatpush1.msra.mxu0 1.0
    %1102 = vmatprep.subr.mxu0 0.0
    %1103 = vmatpush1.msra.mxu0 1.0
    %1104 = vmatprep.subr.mxu0 0.0
    %1105 = vmatpush1.msra.mxu0 1.0
    %1106 = vmatprep.subr.mxu0 0.0
    %1107 = vmatpush1.msra.mxu0 1.0
    %1108 = vmatprep.subr.mxu0 0.0
    %1109 = vmatpush1.msra.mxu0 1.0
    %1110 = vmatprep.subr.mxu0 0.0
    %1111 = vmatpush1.msra.mxu0 1.0
    %1112 = vmatprep.mubr.f32.mxu0 %v882
    %1113 = vmatmul.mubr.f32.gmra.mrb[0].mxu0 %v881
    %v1114 = vpop.f32.mrb[0].mxu0
    %v1115 = vadd.f32 %v1010, %v1114
    %v1116 = vpop.f32.mrb[0].mxu0
    %1117 = vmatprep.mubr.f32.mxu0 %v887
    %1118 = vmatmul.mubr.f32.gmra.mrb[0].mxu0 %v886
    %v1119 = vpop.f32.mrb[0].mxu0
    %v1120 = vadd.f32 %v1015, %v1119
    %v1121 = vpop.f32.mrb[0].mxu0
    %1122 = vmatprep.mubr.f32.mxu0 %v892
    %1123 = vmatmul.mubr.f32.gmra.mrb[0].mxu0 %v891
    %v1124 = vpop.f32.mrb[0].mxu0
    %v1125 = vadd.f32 %v1020, %v1124
    %v1126 = vpop.f32.mrb[0].mxu0
    %1127 = vmatprep.mubr.f32.mxu0 %v897
    %1128 = vmatmul.mubr.f32.gmra.mrb[0].mxu0 %v896
    %v1129 = vpop.f32.mrb[0].mxu0
    %v1130 = vadd.f32 %v1025, %v1129
    %v1131 = vpop.f32.mrb[0].mxu0
    %1132 = vmatprep.mubr.f32.mxu0 %v902
    %1133 = vmatmul.mubr.f32.gmra.mrb[0].mxu0 %v901
    %v1134 = vpop.f32.mrb[0].mxu0
    %v1135 = vadd.f32 %v1030, %v1134
    %v1136 = vpop.f32.mrb[0].mxu0
    %1137 = vmatprep.mubr.f32.mxu0 %v907
    %1138 = vmatmul.mubr.f32.gmra.mrb[0].mxu0 %v906
    %v1139 = vpop.f32.mrb[0].mxu0
    %v1140 = vadd.f32 %v1035, %v1139
    %v1141 = vpop.f32.mrb[0].mxu0
    %1142 = vmatprep.mubr.f32.mxu0 %v912
    %1143 = vmatmul.mubr.f32.gmra.mrb[0].mxu0 %v911
    %v1144 = vpop.f32.mrb[0].mxu0
    %v1145 = vadd.f32 %v1040, %v1144
    %v1146 = vpop.f32.mrb[0].mxu0
    %1147 = vmatprep.mubr.f32.mxu0 %v917
    %1148 = vmatmul.mubr.f32.gmra.mrb[0].mxu0 %v916
    %v1149 = vpop.f32.mrb[0].mxu0
    %v1150 = vadd.f32 %v1045, %v1149
    %v1151 = vpop.f32.mrb[0].mxu0
    %1152 = vdwg.mxu0
    %1153 = vmatprep.subr.mxu0 0.0
    %1154 = vmatpush1.msra.mxu0 1.0
    %1155 = vmatprep.subr.mxu0 0.0
    %1156 = vmatpush1.msra.mxu0 1.0
    %1157 = vmatprep.subr.mxu0 0.0
    %1158 = vmatpush1.msra.mxu0 1.0
    %1159 = vmatprep.subr.mxu0 0.0
    %1160 = vmatpush1.msra.mxu0 1.0
    %1161 = vmatprep.subr.mxu0 0.0
    %1162 = vmatpush1.msra.mxu0 1.0
    %1163 = vmatprep.subr.mxu0 0.0
    %1164 = vmatpush1.msra.mxu0 1.0
    %1165 = vmatprep.subr.mxu0 0.0
    %1166 = vmatpush1.msra.mxu0 1.0
    %1167 = vmatprep.subr.mxu0 0.0
    %1168 = vmatpush1.msra.mxu0 1.0
    %1169 = vmatprep.subr.mxu0 0.0
    %1170 = vmatpush1.msra.mxu0 1.0
    %1171 = vmatprep.subr.mxu0 0.0
    %1172 = vmatpush1.msra.mxu0 1.0
    %1173 = vmatprep.subr.mxu0 0.0
    %1174 = vmatpush1.msra.mxu0 1.0
    %1175 = vmatprep.subr.mxu0 0.0
    %1176 = vmatpush1.msra.mxu0 1.0
    %1177 = vmatprep.subr.mxu0 0.0
    %1178 = vmatpush1.msra.mxu0 1.0
    %1179 = vmatprep.subr.mxu0 0.0
    %1180 = vmatpush1.msra.mxu0 1.0
    %1181 = vmatprep.subr.mxu0 0.0
    %1182 = vmatpush1.msra.mxu0 %v562
    %1183 = vmatprep.subr.mxu0 0.0
    %1184 = vmatpush1.msra.mxu0 0.0
    %1185 = vmatprep.subr.mxu0 0.0
    %1186 = vmatpush1.msra.mxu0 0.0
    %1187 = vmatprep.subr.mxu0 0.0
    %1188 = vmatpush1.msra.mxu0 0.0
    %1189 = vmatprep.subr.mxu0 0.0
    %1190 = vmatpush1.msra.mxu0 0.0
    %1191 = vmatprep.subr.mxu0 0.0
    %1192 = vmatpush1.msra.mxu0 0.0
    %1193 = vmatprep.subr.mxu0 0.0
    %1194 = vmatpush1.msra.mxu0 0.0
    %1195 = vmatprep.subr.mxu0 0.0
    %1196 = vmatpush1.msra.mxu0 0.0
    %1197 = vmatprep.subr.mxu0 0.0
    %1198 = vmatpush1.msra.mxu0 0.0
    %1199 = vmatprep.subr.mxu0 0.0
    %1200 = vmatpush1.msra.mxu0 0.0
    %1201 = vmatprep.subr.mxu0 0.0
    %1202 = vmatpush1.msra.mxu0 0.0
    %1203 = vmatprep.subr.mxu0 0.0
    %1204 = vmatpush1.msra.mxu0 0.0
    %1205 = vmatprep.subr.mxu0 0.0
    %1206 = vmatpush1.msra.mxu0 0.0
    %1207 = vmatprep.subr.mxu0 0.0
    %1208 = vmatpush1.msra.mxu0 0.0
    %1209 = vmatprep.subr.mxu0 0.0
    %1210 = vmatpush1.msra.mxu0 0.0
    %1211 = vmatprep.subr.mxu0 0.0
    %1212 = vmatpush1.msra.mxu0 0.0
    %1213 = vmatprep.subr.mxu0 0.0
    %1214 = vmatpush1.msra.mxu0 0.0
    %1215 = vmatprep.subr.mxu0 0.0
    %1216 = vmatpush1.msra.mxu0 0.0
    %1217 = vmatprep.mubr.f32.mxu0 0.0
    %1218 = vmatmul.mubr.f32.gmra.mrb[0].mxu0 %v920
    %v1219 = vpop.f32.mrb[0].mxu0
    %v1220 = vadd.f32 %v1115, %v1219
    %v1221 = vpop.f32.mrb[0].mxu0
    %1222 = vmatprep.mubr.f32.mxu0 0.0
    %1223 = vmatmul.mubr.f32.gmra.mrb[0].mxu0 %v923
    %v1224 = vpop.f32.mrb[0].mxu0
    %v1225 = vadd.f32 %v1120, %v1224
    %v1226 = vpop.f32.mrb[0].mxu0
    %1227 = vmatprep.mubr.f32.mxu0 0.0
    %1228 = vmatmul.mubr.f32.gmra.mrb[0].mxu0 %v926
    %v1229 = vpop.f32.mrb[0].mxu0
    %v1230 = vadd.f32 %v1125, %v1229
    %v1231 = vpop.f32.mrb[0].mxu0
    %1232 = vmatprep.mubr.f32.mxu0 0.0
    %1233 = vmatmul.mubr.f32.gmra.mrb[0].mxu0 %v929
    %v1234 = vpop.f32.mrb[0].mxu0
    %v1235 = vadd.f32 %v1130, %v1234
    %v1236 = vpop.f32.mrb[0].mxu0
    %1237 = vmatprep.mubr.f32.mxu0 0.0
    %1238 = vmatmul.mubr.f32.gmra.mrb[0].mxu0 %v932
    %v1239 = vpop.f32.mrb[0].mxu0
    %v1240 = vadd.f32 %v1135, %v1239
    %v1241 = vpop.f32.mrb[0].mxu0
    %1242 = vmatprep.mubr.f32.mxu0 0.0
    %1243 = vmatmul.mubr.f32.gmra.mrb[0].mxu0 %v935
    %v1244 = vpop.f32.mrb[0].mxu0
    %v1245 = vadd.f32 %v1140, %v1244
    %v1246 = vpop.f32.mrb[0].mxu0
    %1247 = vmatprep.mubr.f32.mxu0 0.0
    %1248 = vmatmul.mubr.f32.gmra.mrb[0].mxu0 %v938
    %v1249 = vpop.f32.mrb[0].mxu0
    %v1250 = vadd.f32 %v1145, %v1249
    %v1251 = vpop.f32.mrb[0].mxu0
    %1252 = vmatprep.mubr.f32.mxu0 0.0
    %1253 = vmatmul.mubr.f32.gmra.mrb[0].mxu0 %v941
    %v1254 = vpop.f32.mrb[0].mxu0
    %v1255 = vadd.f32 %v1150, %v1254
    %v1256 = vpop.f32.mrb[0].mxu0
    %1257 = vdwg.mxu0
    %v1258 = vmul.f32 %v841, 0.0016
    %v1259 = vmul.f32 %v846, 0.0016
    %v1260 = vmul.f32 %v851, 0.0016
    %v1261 = vmul.f32 %v856, 0.0016
    %v1262 = vmul.f32 %v861, 0.0016
    %v1263 = vmul.f32 %v866, 0.0016
    %v1264 = vmul.f32 %v871, 0.0016
    %v1265 = vmul.f32 %v876, 0.0016
    %v1266 = vmul.f32 %v1220, 0.0016
    %v1267 = vmul.f32 %v1225, 0.0016
    %v1268 = vmul.f32 %v1230, 0.0016
    %v1269 = vmul.f32 %v1235, 0.0016
    %v1270 = vmul.f32 %v1240, 0.0016
    %v1271 = vmul.f32 %v1245, 0.0016
    %v1272 = vmul.f32 %v1250, 0.0016
    %v1273 = vmul.f32 %v1255, 0.0016
    %v1274 = vmul.f32 %v1258, %v1258
    %v1275 = vmul.f32 %v1259, %v1259
    %v1276 = vmul.f32 %v1260, %v1260
    %v1277 = vmul.f32 %v1261, %v1261
    %v1278 = vmul.f32 %v1262, %v1262
    %v1279 = vmul.f32 %v1263, %v1263
    %v1280 = vmul.f32 %v1264, %v1264
    %v1281 = vmul.f32 %v1265, %v1265
    %v1282 = vsub.f32 %v1266, %v1274
    %v1283 = vsub.f32 %v1267, %v1275
    %v1284 = vsub.f32 %v1268, %v1276
    %v1285 = vsub.f32 %v1269, %v1277
    %v1286 = vsub.f32 %v1270, %v1278
    %v1287 = vsub.f32 %v1271, %v1279
    %v1288 = vsub.f32 %v1272, %v1280
    %v1289 = vsub.f32 %v1273, %v1281
    %v1290 = vmax.f32 %v1282, 0.0
    %v1291 = vmax.f32 %v1283, 0.0
    %v1292 = vmax.f32 %v1284, 0.0
    %v1293 = vmax.f32 %v1285, 0.0
    %v1294 = vmax.f32 %v1286, 0.0
    %v1295 = vmax.f32 %v1287, 0.0
    %v1296 = vmax.f32 %v1288, 0.0
    %v1297 = vmax.f32 %v1289, 0.0
    %v1298 = vld [vmem:[%s2] sm:$0xff]
    %v1299 = vld [vmem:[%s2 + $0x8] sm:$0xff]
    %v1300 = vld [vmem:[%s2 + $0x10] sm:$0xff]
    %v1301 = vld [vmem:[%s2 + $0x18] sm:$0xff]
    %v1302 = vld [vmem:[%s2 + $0x20] sm:$0xff]
    %v1303 = vld [vmem:[%s2 + $0x28] sm:$0xff]
    %v1304 = vld [vmem:[%s2 + $0x30] sm:$0xff]
    %v1305 = vld [vmem:[%s2 + $0x38] sm:$0xff]
    %v1306 = vadd.f32 %v1290, 0.001
    %v1307 = vadd.f32 %v1291, 0.001
    %v1308 = vadd.f32 %v1292, 0.001
    %v1309 = vadd.f32 %v1293, 0.001
    %v1310 = vadd.f32 %v1294, 0.001
    %v1311 = vadd.f32 %v1295, 0.001
    %v1312 = vadd.f32 %v1296, 0.001
    %v1313 = vadd.f32 %v1297, 0.001
    %v1314 = vrsqrt.pop %v1306
    %v1315 = vrsqrt.pop %v1307
    %v1316 = vrsqrt.pop %v1308
    %v1317 = vrsqrt.pop %v1309
    %v1318 = vrsqrt.pop %v1310
    %v1319 = vrsqrt.pop %v1311
    %v1320 = vrsqrt.pop %v1312
    %v1321 = vrsqrt.pop %v1313
    %v1322 = vmul.f32 %v1314, %v1298
    %v1323 = vmul.f32 %v1315, %v1299
    %v1324 = vmul.f32 %v1316, %v1300
    %v1325 = vmul.f32 %v1317, %v1301
    %v1326 = vmul.f32 %v1318, %v1302
    %v1327 = vmul.f32 %v1319, %v1303
    %v1328 = vmul.f32 %v1320, %v1304
    %v1329 = vmul.f32 %v1321, %v1305
    %v1330 = vmul.f32 %v1258, %v1322
    %v1331 = vmul.f32 %v1259, %v1323
    %v1332 = vmul.f32 %v1260, %v1324
    %v1333 = vmul.f32 %v1261, %v1325
    %v1334 = vmul.f32 %v1262, %v1326
    %v1335 = vmul.f32 %v1263, %v1327
    %v1336 = vmul.f32 %v1264, %v1328
    %v1337 = vmul.f32 %v1265, %v1329
    %1346 = vrot.lane.b32.xlu0 %v1330, 1
    %v1347 = vpop.permute.xlu0 %1346
    %1348 = vrot.lane.b32.xlu0 %v1331, 1
    %v1349 = vpop.permute.xlu0 %1348
    %1350 = vrot.lane.b32.xlu0 %v1332, 1
    %v1351 = vpop.permute.xlu0 %1350
    %1352 = vrot.lane.b32.xlu0 %v1333, 1
    %v1353 = vpop.permute.xlu0 %1352
    %1354 = vrot.lane.b32.xlu0 %v1334, 1
    %v1355 = vpop.permute.xlu0 %1354
    %1356 = vrot.lane.b32.xlu0 %v1335, 1
    %v1357 = vpop.permute.xlu0 %1356
    %1358 = vrot.lane.b32.xlu0 %v1336, 1
    %v1359 = vpop.permute.xlu0 %1358
    %1360 = vrot.lane.b32.xlu0 %v1337, 1
    %v1361 = vpop.permute.xlu0 %1360
    %v1370 = vsub.f32 %v1298, %v1347
    %v1371 = vsub.f32 %v1299, %v1349
    %v1372 = vsub.f32 %v1300, %v1351
    %v1373 = vsub.f32 %v1301, %v1353
    %v1374 = vsub.f32 %v1302, %v1355
    %v1375 = vsub.f32 %v1303, %v1357
    %v1376 = vsub.f32 %v1304, %v1359
    %v1377 = vsub.f32 %v1305, %v1361
    %1379 = vset.pattern.permute.xlu0 0
    %1380 = vperm.xlu0 %1379, %v1322
    %v1381 = vpop.permute.xlu0 %1380
    %1384 = vset.pattern.permute.xlu0 0
    %1385 = vperm.xlu0 %1384, %v1323
    %v1386 = vpop.permute.xlu0 %1385
    %1389 = vset.pattern.permute.xlu0 0
    %1390 = vperm.xlu0 %1389, %v1324
    %v1391 = vpop.permute.xlu0 %1390
    %1394 = vset.pattern.permute.xlu0 0
    %1395 = vperm.xlu0 %1394, %v1325
    %v1396 = vpop.permute.xlu0 %1395
    %1399 = vset.pattern.permute.xlu0 0
    %1400 = vperm.xlu0 %1399, %v1326
    %v1401 = vpop.permute.xlu0 %1400
    %1404 = vset.pattern.permute.xlu0 0
    %1405 = vperm.xlu0 %1404, %v1327
    %v1406 = vpop.permute.xlu0 %1405
    %1409 = vset.pattern.permute.xlu0 0
    %1410 = vperm.xlu0 %1409, %v1328
    %v1411 = vpop.permute.xlu0 %1410
    %1414 = vset.pattern.permute.xlu0 0
    %1415 = vperm.xlu0 %1414, %v1329
    %v1416 = vpop.permute.xlu0 %1415
    %v1418 = vmul.f32 %v271, %v1381
    %v1419 = vmul.f32 %v273, %v1381
    %v1420 = vmul.f32 %v384, %v1381
    %v1421 = vmul.f32 %v386, %v1381
    %v1422 = vmul.f32 %v497, %v1381
    %v1423 = vmul.f32 %v277, %v1386
    %v1424 = vmul.f32 %v279, %v1386
    %v1425 = vmul.f32 %v390, %v1386
    %v1426 = vmul.f32 %v392, %v1386
    %v1427 = vmul.f32 %v502, %v1386
    %v1428 = vmul.f32 %v283, %v1391
    %v1429 = vmul.f32 %v285, %v1391
    %v1430 = vmul.f32 %v396, %v1391
    %v1431 = vmul.f32 %v398, %v1391
    %v1432 = vmul.f32 %v507, %v1391
    %v1433 = vmul.f32 %v289, %v1396
    %v1434 = vmul.f32 %v291, %v1396
    %v1435 = vmul.f32 %v402, %v1396
    %v1436 = vmul.f32 %v404, %v1396
    %v1437 = vmul.f32 %v512, %v1396
    %v1438 = vmul.f32 %v295, %v1401
    %v1439 = vmul.f32 %v297, %v1401
    %v1440 = vmul.f32 %v408, %v1401
    %v1441 = vmul.f32 %v410, %v1401
    %v1442 = vmul.f32 %v517, %v1401
    %v1443 = vmul.f32 %v301, %v1406
    %v1444 = vmul.f32 %v303, %v1406
    %v1445 = vmul.f32 %v414, %v1406
    %v1446 = vmul.f32 %v416, %v1406
    %v1447 = vmul.f32 %v522, %v1406
    %v1448 = vmul.f32 %v307, %v1411
    %v1449 = vmul.f32 %v309, %v1411
    %v1450 = vmul.f32 %v420, %v1411
    %v1451 = vmul.f32 %v422, %v1411
    %v1452 = vmul.f32 %v527, %v1411
    %v1453 = vmul.f32 %v313, %v1416
    %v1454 = vmul.f32 %v315, %v1416
    %v1455 = vmul.f32 %v426, %v1416
    %v1456 = vmul.f32 %v428, %v1416
    %v1457 = vmul.f32 %v532, %v1416
    %1459 = vset.pattern.permute.xlu0 1
    %1460 = vperm.xlu0 %1459, %v1370
    %v1461 = vpop.permute.xlu0 %1460
    %1464 = vset.pattern.permute.xlu0 1
    %1465 = vperm.xlu0 %1464, %v1371
    %v1466 = vpop.permute.xlu0 %1465
    %1469 = vset.pattern.permute.xlu0 1
    %1470 = vperm.xlu0 %1469, %v1372
    %v1471 = vpop.permute.xlu0 %1470
    %1474 = vset.pattern.permute.xlu0 1
    %1475 = vperm.xlu0 %1474, %v1373
    %v1476 = vpop.permute.xlu0 %1475
    %1479 = vset.pattern.permute.xlu0 1
    %1480 = vperm.xlu0 %1479, %v1374
    %v1481 = vpop.permute.xlu0 %1480
    %1484 = vset.pattern.permute.xlu0 1
    %1485 = vperm.xlu0 %1484, %v1375
    %v1486 = vpop.permute.xlu0 %1485
    %1489 = vset.pattern.permute.xlu0 1
    %1490 = vperm.xlu0 %1489, %v1376
    %v1491 = vpop.permute.xlu0 %1490
    %1494 = vset.pattern.permute.xlu0 1
    %1495 = vperm.xlu0 %1494, %v1377
    %v1496 = vpop.permute.xlu0 %1495
    %v1498 = vadd.f32 %v1418, %v1461
    %v1499 = vadd.f32 %v1419, %v1461
    %v1500 = vadd.f32 %v1420, %v1461
    %v1501 = vadd.f32 %v1421, %v1461
    %v1502 = vadd.f32 %v1422, %v1461
    %v1503 = vadd.f32 %v1423, %v1466
    %v1504 = vadd.f32 %v1424, %v1466
    %v1505 = vadd.f32 %v1425, %v1466
    %v1506 = vadd.f32 %v1426, %v1466
    %v1507 = vadd.f32 %v1427, %v1466
    %v1508 = vadd.f32 %v1428, %v1471
    %v1509 = vadd.f32 %v1429, %v1471
    %v1510 = vadd.f32 %v1430, %v1471
    %v1511 = vadd.f32 %v1431, %v1471
    %v1512 = vadd.f32 %v1432, %v1471
    %v1513 = vadd.f32 %v1433, %v1476
    %v1514 = vadd.f32 %v1434, %v1476
    %v1515 = vadd.f32 %v1435, %v1476
    %v1516 = vadd.f32 %v1436, %v1476
    %v1517 = vadd.f32 %v1437, %v1476
    %v1518 = vadd.f32 %v1438, %v1481
    %v1519 = vadd.f32 %v1439, %v1481
    %v1520 = vadd.f32 %v1440, %v1481
    %v1521 = vadd.f32 %v1441, %v1481
    %v1522 = vadd.f32 %v1442, %v1481
    %v1523 = vadd.f32 %v1443, %v1486
    %v1524 = vadd.f32 %v1444, %v1486
    %v1525 = vadd.f32 %v1445, %v1486
    %v1526 = vadd.f32 %v1446, %v1486
    %v1527 = vadd.f32 %v1447, %v1486
    %v1528 = vadd.f32 %v1448, %v1491
    %v1529 = vadd.f32 %v1449, %v1491
    %v1530 = vadd.f32 %v1450, %v1491
    %v1531 = vadd.f32 %v1451, %v1491
    %v1532 = vadd.f32 %v1452, %v1491
    %v1533 = vadd.f32 %v1453, %v1496
    %v1534 = vadd.f32 %v1454, %v1496
    %v1535 = vadd.f32 %v1455, %v1496
    %v1536 = vadd.f32 %v1456, %v1496
    %v1537 = vadd.f32 %v1457, %v1496
    %v1538 = vmax.f32 %v1498, 0.0
    %v1539 = vmax.f32 %v1499, 0.0
    %v1540 = vmax.f32 %v1500, 0.0
    %v1541 = vmax.f32 %v1501, 0.0
    %v1542 = vmax.f32 %v1502, 0.0
    %v1543 = vmax.f32 %v1503, 0.0
    %v1544 = vmax.f32 %v1504, 0.0
    %v1545 = vmax.f32 %v1505, 0.0
    %v1546 = vmax.f32 %v1506, 0.0
    %v1547 = vmax.f32 %v1507, 0.0
    %v1548 = vmax.f32 %v1508, 0.0
    %v1549 = vmax.f32 %v1509, 0.0
    %v1550 = vmax.f32 %v1510, 0.0
    %v1551 = vmax.f32 %v1511, 0.0
    %v1552 = vmax.f32 %v1512, 0.0
    %v1553 = vmax.f32 %v1513, 0.0
    %v1554 = vmax.f32 %v1514, 0.0
    %v1555 = vmax.f32 %v1515, 0.0
    %v1556 = vmax.f32 %v1516, 0.0
    %v1557 = vmax.f32 %v1517, 0.0
    %v1558 = vmax.f32 %v1518, 0.0
    %v1559 = vmax.f32 %v1519, 0.0
    %v1560 = vmax.f32 %v1520, 0.0
    %v1561 = vmax.f32 %v1521, 0.0
    %v1562 = vmax.f32 %v1522, 0.0
    %v1563 = vmax.f32 %v1523, 0.0
    %v1564 = vmax.f32 %v1524, 0.0
    %v1565 = vmax.f32 %v1525, 0.0
    %v1566 = vmax.f32 %v1526, 0.0
    %v1567 = vmax.f32 %v1527, 0.0
    %v1568 = vmax.f32 %v1528, 0.0
    %v1569 = vmax.f32 %v1529, 0.0
    %v1570 = vmax.f32 %v1530, 0.0
    %v1571 = vmax.f32 %v1531, 0.0
    %v1572 = vmax.f32 %v1532, 0.0
    %v1573 = vmax.f32 %v1533, 0.0
    %v1574 = vmax.f32 %v1534, 0.0
    %v1575 = vmax.f32 %v1535, 0.0
    %v1576 = vmax.f32 %v1536, 0.0
    %v1577 = vmax.f32 %v1537, 0.0
    %1578 = vst [vmem:[#allocation7] sm:$0xff] %v1538
    %1579 = vst [vmem:[#allocation7 + $0x8] sm:$0xff] %v1539
    %1580 = vst [vmem:[#allocation7 + $0x10] sm:$0xff] %v1540
    %1581 = vst [vmem:[#allocation7 + $0x18] sm:$0xff] %v1541
    %1582 = vst.msk [vmem:[#allocation7 + $0x20] sm:$0xff] %vm535, %v1542
    %1583 = vst [vmem:[#allocation7 + $0x28] sm:$0xff] %v1543
    %1584 = vst [vmem:[#allocation7 + $0x30] sm:$0xff] %v1544
    %1585 = vst [vmem:[#allocation7 + $0x38] sm:$0xff] %v1545
    %1586 = vst [vmem:[#allocation7 + $0x40] sm:$0xff] %v1546
    %1587 = vst.msk [vmem:[#allocation7 + $0x48] sm:$0xff] %vm535, %v1547
    %1588 = vst [vmem:[#allocation7 + $0x50] sm:$0xff] %v1548
    %1589 = vst [vmem:[#allocation7 + $0x58] sm:$0xff] %v1549
    %1590 = vst [vmem:[#allocation7 + $0x60] sm:$0xff] %v1550
    %1591 = vst [vmem:[#allocation7 + $0x68] sm:$0xff] %v1551
    %1592 = vst.msk [vmem:[#allocation7 + $0x70] sm:$0xff] %vm535, %v1552
    %1593 = vst [vmem:[#allocation7 + $0x78] sm:$0xff] %v1553
    %1594 = vst [vmem:[#allocation7 + $0x80] sm:$0xff] %v1554
    %1595 = vst [vmem:[#allocation7 + $0x88] sm:$0xff] %v1555
    %1596 = vst [vmem:[#allocation7 + $0x90] sm:$0xff] %v1556
    %1597 = vst.msk [vmem:[#allocation7 + $0x98] sm:$0xff] %vm535, %v1557
    %1598 = vst [vmem:[#allocation7 + $0xa0] sm:$0xff] %v1558
    %1599 = vst [vmem:[#allocation7 + $0xa8] sm:$0xff] %v1559
    %1600 = vst [vmem:[#allocation7 + $0xb0] sm:$0xff] %v1560
    %1601 = vst [vmem:[#allocation7 + $0xb8] sm:$0xff] %v1561
    %1602 = vst.msk [vmem:[#allocation7 + $0xc0] sm:$0xff] %vm535, %v1562
    %1603 = vst [vmem:[#allocation7 + $0xc8] sm:$0xff] %v1563
    %1604 = vst [vmem:[#allocation7 + $0xd0] sm:$0xff] %v1564
    %1605 = vst [vmem:[#allocation7 + $0xd8] sm:$0xff] %v1565
    %1606 = vst [vmem:[#allocation7 + $0xe0] sm:$0xff] %v1566
    %1607 = vst.msk [vmem:[#allocation7 + $0xe8] sm:$0xff] %vm535, %v1567
    %1608 = vst [vmem:[#allocation7 + $0xf0] sm:$0xff] %v1568
    %1609 = vst [vmem:[#allocation7 + $0xf8] sm:$0xff] %v1569
    %1610 = vst [vmem:[#allocation7 + $0x100] sm:$0xff] %v1570
    %1611 = vst [vmem:[#allocation7 + $0x108] sm:$0xff] %v1571
    %1612 = vst.msk [vmem:[#allocation7 + $0x110] sm:$0xff] %vm535, %v1572
    %1613 = vst [vmem:[#allocation7 + $0x118] sm:$0xff] %v1573
    %1614 = vst [vmem:[#allocation7 + $0x120] sm:$0xff] %v1574
    %1615 = vst [vmem:[#allocation7 + $0x128] sm:$0xff] %v1575
    %1616 = vst [vmem:[#allocation7 + $0x130] sm:$0xff] %v1576
    %1617 = vst.msk [vmem:[#allocation7 + $0x138] sm:$0xff] %vm535, %v1577
    // Predicated region
    $region22: #{tpu_custom_call.1} parent=1 // pred_check
      _
    $region23: #{tpu_custom_call.1} parent=1 // pred_check_branch
      %1619 = sbr.rel (0) target = $region25
    $region24: #{tpu_custom_call.1} parent=1 // pred_region
      %s1621 = ssub.s32 5120, 5120
      %1622 = vsyncadd [#allocation4], %s1621
      %s1623 = sshll.u32 [#allocation7], 4
      %s1624 = int_to_ptr.vmem [resolvable:$true] %s1623
      %1629 = dma.vmem_to_hbm [thread:$0]  %s1624, 5120, %s3, [#allocation4], 640, 640, 40
    $region25: #{tpu_custom_call.1} parent=1 // pred_fallthru
      _
    // Predicated region
    $region26: #{tpu_custom_call.1} parent=1 // pred_check
      _
    $region27: #{tpu_custom_call.1} parent=1 // pred_check_branch
      %1631 = sbr.rel (0) target = $region29
    $region28: #{tpu_custom_call.1} parent=1 // pred_region
      %1632 = dma.done [#allocation4], 5120
    $region29: #{tpu_custom_call.1} parent=1 // pred_fallthru
      _
    %1633 = vsyncpa [#allocation3], 1
    %1634 = vsyncpa [#allocation6], 1
    %1635 = vsyncpa [#allocation4], 1

</llo_original>
